<compile_context>
chip_gen: v7x
topology: tpu7x:2x2x1
jax: 0.10.0
libtpu: 0.0.40
codegen_flags: <defaults>
</compile_context>

<pallas_src>
import math
import numpy as np
import jax
import jax.numpy as jnp
from jax import lax
from jax.experimental import pallas as pl
from jax.experimental.pallas import tpu as pltpu

_LANES = 128
_SUBLANES = 8
_EDGE_TILE = 128            # edge-tile size for the blocked path (lane-dense)
_SENT = 2 ** 30             # index sentinel: never matches any mask row

# dot_general dims: contract dim 0 of LHS with dim 0 of RHS  (i.e. lhs^T @ rhs)
_TN_DIMS = (((0,), (0,)), ((), ()))


def _round_up(x, m):
    return (x + m - 1) // m * m


def _pad2(x, rows, cols):
    r, c = x.shape
    return jnp.pad(x, ((0, rows - r), (0, cols - c)))


# -----------------------------------------------------------------------------
# In-kernel helpers.
# -----------------------------------------------------------------------------
def _gather_mask(send_row, recp_row, rows, cols):
    """Combined one-hot mask, nodes on sublanes, edges on lanes.

    gmaskT[r, i] = 1  iff  (r < Np and send[i] == r)
                       or  (r >= Np and rec[i] == r - Np)
    send_row : [1, cols] node ids (or _SENT for padded edges)
    recp_row : [1, cols] rec ids + Np (or _SENT for padded edges)
    """
    iota = lax.broadcasted_iota(jnp.int32, (rows, cols), 0)
    return ((iota == send_row) | (iota == recp_row)).astype(jnp.float32)


def _fused_gather(gmaskT, a_send, a_rec):
    """sum_r gmaskT[r, i] * [a_send; a_rec][r, :]  ->  a_send[send[i]] + a_rec[rec[i]]."""
    ab = jnp.concatenate([a_send, a_rec], axis=0)          # [2Np, Hp]
    return lax.dot_general(gmaskT, ab, _TN_DIMS,
                           preferred_element_type=jnp.float32)  # [Ep, Hp]


# -----------------------------------------------------------------------------
# Kernel 1: whole layer forward for one graph (everything resident in VMEM).
# -----------------------------------------------------------------------------
def _lspe_single_shot_kernel(
    send_ref, recp_ref,                          # [1, Ep] int32 (sentinel-padded)
    h_ref, e_ref, p_ref,                         # [Np,Hp], [Ep,Hp], [Np,Hp]
    w_h_node_ref,                                # [Hp,3Hp]  W_hm_send_h | W_hm_rec_h | W_hu_self
    w_p_node_ref,                                # [Hp,5Hp]  W_hm_send_p | W_hm_rec_p | W_pm_send | W_pm_rec | W_pu_self
    w_e_node_ref,                                # [Hp,2Hp]  W_hm_e | W_eu_e
    w_hu_agg_ref,                                # [Hp,Hp]
    w_hn_edge_ref,                               # [Hp,2Hp]  W_eu_send | W_eu_rec
    w_e_pm_ref,                                  # [Hp,Hp]   W_pm_e
    w_pu_agg_ref,                                # [Hp,Hp]
    b_hm_ref, b_hu_ref, b_eu_ref, b_pm_ref, b_pu_ref,   # [1,Hp] each
    h_out_ref, e_out_ref, p_out_ref,
):
    np_rows, hp = h_ref.shape
    f32 = jnp.float32

    def dot(a, b):
        return jnp.dot(a, b, preferred_element_type=f32)

    # One combined one-hot mask for both gather and scatter (no srec buffer).
    gmaskT = _gather_mask(send_ref[...], recp_ref[...], 2 * np_rows, e_ref.shape[0])
    grecT = gmaskT[np_rows:, :]                  # [Np, Ep]: scatter_add over rec

    h = h_ref[...].astype(f32)
    e = e_ref[...].astype(f32)
    p = p_ref[...].astype(f32)

    # Node/edge-side projections (reassociated gather-then-linear; fused weights).
    h_proj = dot(h, w_h_node_ref[...])           # [Np, 3Hp]
    p_proj = dot(p, w_p_node_ref[...])           # [Np, 5Hp]
    e_proj = dot(e, w_e_node_ref[...])           # [Ep, 2Hp]

    h_hm_send = h_proj[:, 0 * hp:1 * hp]
    h_hm_rec = h_proj[:, 1 * hp:2 * hp]
    h_hu_self = h_proj[:, 2 * hp:3 * hp]

    p_hm_send = p_proj[:, 0 * hp:1 * hp]
    p_hm_rec = p_proj[:, 1 * hp:2 * hp]
    p_pm_send = p_proj[:, 2 * hp:3 * hp]
    p_pm_rec = p_proj[:, 3 * hp:4 * hp]
    p_pu_self = p_proj[:, 4 * hp:5 * hp]

    e_hm = e_proj[:, 0 * hp:1 * hp]
    e_eu = e_proj[:, 1 * hp:2 * hp]

    # h messages (edge rows) + scatter_add over rec.
    h_msg = (_fused_gather(gmaskT, h_hm_send + p_hm_send, h_hm_rec + p_hm_rec)
             + e_hm + b_hm_ref[...])             # [Ep, Hp]
    h_agg = dot(grecT, h_msg)                    # [Np, Hp]

    # h update.  NOTE: padded node rows end up equal to b_hu (bias broadcasts);
    # they are never selected by the gather mask and are sliced off on return.
    h_new = h_hu_self + dot(h_agg, w_hu_agg_ref[...]) + b_hu_ref[...]

    # e update (uses updated h).
    hn_proj = dot(h_new, w_hn_edge_ref[...])     # [Np, 2Hp]
    e_new = (_fused_gather(gmaskT, hn_proj[:, 0:hp], hn_proj[:, hp:2 * hp])
             + e_eu + b_eu_ref[...])             # [Ep, Hp]

    # p messages + scatter_add + p update.
    p_msg = (_fused_gather(gmaskT, p_pm_send, p_pm_rec)
             + dot(e_new, w_e_pm_ref[...]) + b_pm_ref[...])  # [Ep, Hp]
    p_agg = dot(grecT, p_msg)                    # [Np, Hp]
    p_new = p_pu_self + dot(p_agg, w_pu_agg_ref[...]) + b_pu_ref[...]

    h_out_ref[...] = h_new.astype(h_out_ref.dtype)
    e_out_ref[...] = e_new.astype(e_out_ref.dtype)
    p_out_ref[...] = p_new.astype(p_out_ref.dtype)


# -----------------------------------------------------------------------------
# Blocked path kernels (edge-tile grid, "arbitrary", resident accumulators).
# -----------------------------------------------------------------------------
def _lspe_h_phase_kernel(send_ref, recp_ref, ab_hm_ref, e_hm_ref, b_hm_ref,
                         h_agg_ref):
    two_np, _ = ab_hm_ref.shape
    np_rows = two_np // 2
    te = e_hm_ref.shape[0]
    f32 = jnp.float32

    gmaskT = _gather_mask(send_ref[...], recp_ref[...], two_np, te)   # [2Np, TE]
    h_msg = (lax.dot_general(gmaskT, ab_hm_ref[...].astype(f32), _TN_DIMS,
                             preferred_element_type=f32)
             + e_hm_ref[...].astype(f32) + b_hm_ref[...].astype(f32))  # [TE, Hp]

    @pl.when(pl.program_id(0) == 0)
    def _init():
        h_agg_ref[...] = jnp.zeros_like(h_agg_ref)

    h_agg_ref[...] += jnp.dot(gmaskT[np_rows:, :], h_msg,
                              preferred_element_type=f32)


def _lspe_ep_phase_kernel(send_ref, recp_ref, ab_e_ref, ab_p_ref, e_eu_ref,
                          w_e_pm_ref, b_eu_ref, b_pm_ref,
                          e_out_ref, p_agg_ref):
    two_np, _ = ab_e_ref.shape
    np_rows = two_np // 2
    te = e_eu_ref.shape[0]
    f32 = jnp.float32

    gmaskT = _gather_mask(send_ref[...], recp_ref[...], two_np, te)   # [2Np, TE]

    e_new = (lax.dot_general(gmaskT, ab_e_ref[...].astype(f32), _TN_DIMS,
                             preferred_element_type=f32)
             + e_eu_ref[...].astype(f32) + b_eu_ref[...].astype(f32))  # [TE, Hp]
    e_out_ref[...] = e_new.astype(e_out_ref.dtype)

    p_msg = (lax.dot_general(gmaskT, ab_p_ref[...].astype(f32), _TN_DIMS,
                             preferred_element_type=f32)
             + jnp.dot(e_new, w_e_pm_ref[...], preferred_element_type=f32)
             + b_pm_ref[...].astype(f32))                              # [TE, Hp]

    @pl.when(pl.program_id(0) == 0)
    def _init():
        p_agg_ref[...] = jnp.zeros_like(p_agg_ref)

    p_agg_ref[...] += jnp.dot(gmaskT[np_rows:, :], p_msg,
                              preferred_element_type=f32)


# -----------------------------------------------------------------------------
# VMEM budget / cost estimate helpers.
# -----------------------------------------------------------------------------
def _vmem_cap_bytes():
    phys = None
    try:
        info = pltpu.get_tpu_info()
        phys = getattr(info, "vmem_capacity_bytes", None)
    except Exception:
        phys = None
    if not phys:
        phys = 64 * 1024 * 1024          # conservative default (v7x per-core)
    return int(phys) - 8 * 1024 * 1024   # headroom for compiler scratch


def _single_shot_vmem_bytes(Np, Ep, Hp):
    f = 4
    io_bytes = ((2 * Np + Ep) * Hp + 15 * Hp * Hp + 5 * Hp) * f + 2 * Ep * 4
    io_bytes += (2 * Np + Ep) * Hp * f                 # outputs
    mask = 2 * Np * Ep * f                             # combined gather/scatter mask
    proj = (3 + 5 + 2) * Np * Hp * f + 2 * Ep * Hp * f
    stacks = 3 * 2 * Np * Hp * f                       # fused-gather operand stacks
    msgs = 3 * Ep * Hp * f                             # h_msg, e_new, p_msg
    aggs = 6 * Np * Hp * f                             # aggregates + updates
    return int(1.25 * (io_bytes + mask + proj + stacks + msgs + aggs))


def _blocked_vmem_bytes(Np, TE, Hp):
    f = 4
    per_step = (2 * Np * TE * f          # per-tile mask
                + 2 * 3 * TE * Hp * f    # double-buffered edge tiles (in + out)
                + 4 * Np * Hp * f        # stacked node operands
                + 2 * Np * Hp * f        # resident accumulators
                + Hp * Hp * f            # w_e_pm
                + 2 * TE * Hp * f)       # per-tile message temporaries
    return int(1.5 * per_step)


def _cost(flops, bytes_accessed):
    return pl.CostEstimate(flops=int(flops), transcendentals=0,
                           bytes_accessed=int(bytes_accessed))


# -----------------------------------------------------------------------------
# Parameter fusion (hoisted out of the per-call path; run once per layer).
# -----------------------------------------------------------------------------
def prepare_fused_params(params, num_hidden):
    H = num_hidden
    Hp = _round_up(H, _LANES)

    def blocks(name, k):
        w = params[name + "_w"].T                # [k*H, H] in concat-input order
        return [w[i * H:(i + 1) * H, :] for i in range(k)]

    def padb(w):                                 # [H,H] -> [Hp,Hp] zero-padded
        return jnp.pad(w, ((0, Hp - H), (0, Hp - H)))

    def bias(name):
        return jnp.pad(params[name + "_b"], (0, Hp - H)).reshape(1, Hp)

    hm = blocks("h_message_mlp", 5)   # h_send, p_send, h_rec, p_rec, e
    hu = blocks("h_update", 2)        # h, h_agg
    eu = blocks("e_update", 3)        # h_new_send, h_new_rec, e
    pm = blocks("p_message_mlp", 3)   # p_send, p_rec, e_new
    pu = blocks("p_update", 2)        # p, p_agg

    return {
        "w_h_node": jnp.concatenate([padb(hm[0]), padb(hm[2]), padb(hu[0])], axis=1),
        "w_p_node": jnp.concatenate([padb(hm[1]), padb(hm[3]), padb(pm[0]),
                                     padb(pm[1]), padb(pu[0])], axis=1),
        "w_e_node": jnp.concatenate([padb(hm[4]), padb(eu[2])], axis=1),
        "w_hu_agg": padb(hu[1]),
        "w_hn_edge": jnp.concatenate([padb(eu[0]), padb(eu[1])], axis=1),
        "w_e_pm": padb(pm[2]),
        "w_pu_agg": padb(pu[1]),
        "b_hm": bias("h_message_mlp"),
        "b_hu": bias("h_update"),
        "b_eu": bias("e_update"),
        "b_pm": bias("p_message_mlp"),
        "b_pu": bias("p_update"),
    }


# -----------------------------------------------------------------------------
# Forward wrappers.
# -----------------------------------------------------------------------------
def _forward_single_shot(send_row, recp_row, h_p, e_p, p_p, fp, vmem_limit):
    Np, Hp = h_p.shape
    Ep = e_p.shape[0]

    flops = (2 * (Np * 12 + Ep * 3) * Hp * Hp      # projections / updates
             + 2 * 3 * Ep * (2 * Np) * Hp          # fused gathers
             + 2 * 2 * Np * Ep * Hp)               # scatters
    bytes_accessed = ((2 * Np + Ep) * Hp * 2 + 15 * Hp * Hp + 5 * Hp) * 4 + 2 * Ep * 4

    vmem = pl.BlockSpec(memory_space=pltpu.MemorySpace.VMEM)
    inputs = (send_row, recp_row, h_p, e_p, p_p,
              fp["w_h_node"], fp["w_p_node"], fp["w_e_node"], fp["w_hu_agg"],
              fp["w_hn_edge"], fp["w_e_pm"], fp["w_pu_agg"],
              fp["b_hm"], fp["b_hu"], fp["b_eu"], fp["b_pm"], fp["b_pu"])
    out_shape = (jax.ShapeDtypeStruct((Np, Hp), h_p.dtype),
                 jax.ShapeDtypeStruct((Ep, Hp), e_p.dtype),
                 jax.ShapeDtypeStruct((Np, Hp), p_p.dtype))
    return pl.pallas_call(
        _lspe_single_shot_kernel,
        out_shape=out_shape,
        in_specs=[vmem] * len(inputs),
        out_specs=(vmem, vmem, vmem),
        compiler_params=pltpu.CompilerParams(vmem_limit_bytes=vmem_limit),
        cost_estimate=_cost(flops, bytes_accessed),
    )(*inputs)


def _forward_blocked(send_row, recp_row, h_p, e_p, p_p, fp, vmem_limit, N, E, H):
    Np, Hp = h_p.shape
    Ep = e_p.shape[0]
    TE = _EDGE_TILE
    T = Ep // TE
    f32 = jnp.float32

    # Dense node/edge-side projections as plain XLA matmuls (MXU-friendly).
    # TODO(synk): fold these into the edge-grid kernels to pipeline with edge DMA.
    h_proj = h_p.astype(f32) @ fp["w_h_node"]            # [Np, 3Hp]
    p_proj = p_p.astype(f32) @ fp["w_p_node"]            # [Np, 5Hp]
    e_proj = e_p.astype(f32) @ fp["w_e_node"]            # [Ep, 2Hp]

    ab_hm = jnp.concatenate([h_proj[:, :Hp] + p_proj[:, :Hp],
                             h_proj[:, Hp:2 * Hp] + p_proj[:, Hp:2 * Hp]], axis=0)
    e_hm = e_proj[:, :Hp]
    e_eu = e_proj[:, Hp:2 * Hp]

    idx_spec = pl.BlockSpec((1, TE), lambda t: (0, t))
    tile_spec = pl.BlockSpec((TE, Hp), lambda t: (t, 0))

    def const_spec(shape):
        return pl.BlockSpec(shape, lambda t: (0, 0))

    cparams = pltpu.CompilerParams(dimension_semantics=("arbitrary",),
                                   vmem_limit_bytes=vmem_limit)

    # Phase 1: h messages + scatter_add over rec (accumulator resident in VMEM).
    flops1 = 2 * Ep * (2 * Np) * Hp + 2 * Np * Ep * Hp
    bytes1 = (2 * Ep + (2 * Np + Ep + 1 + Np) * Hp) * 4
    h_agg = pl.pallas_call(
        _lspe_h_phase_kernel,
        out_shape=jax.ShapeDtypeStruct((Np, Hp), f32),
        grid=(T,),
        in_specs=[idx_spec, idx_spec, const_spec((2 * Np, Hp)),
                  tile_spec, const_spec((1, Hp))],
        out_specs=pl.BlockSpec((Np, Hp), lambda t: (0, 0)),
        compiler_params=cparams,
        cost_estimate=_cost(flops1, bytes1),
    )(send_row, recp_row, ab_hm, e_hm, fp["b_hm"])

    # h update (dense, small).
    h_new = h_proj[:, 2 * Hp:3 * Hp] + h_agg @ fp["w_hu_agg"] + fp["b_hu"]
    hn_proj = h_new @ fp["w_hn_edge"]                    # [Np, 2Hp]
    ab_e = jnp.concatenate([hn_proj[:, :Hp], hn_proj[:, Hp:2 * Hp]], axis=0)
    ab_p = jnp.concatenate([p_proj[:, 2 * Hp:3 * Hp], p_proj[:, 3 * Hp:4 * Hp]], axis=0)

    # Phase 2: e update + p messages + scatter_add over rec.
    flops2 = 2 * 2 * Ep * (2 * Np) * Hp + 2 * Ep * Hp * Hp + 2 * Np * Ep * Hp
    bytes2 = (2 * Ep + (4 * Np + 2 * Ep + Hp + 2 + Np) * Hp) * 4
    e_new, p_agg = pl.pallas_call(
        _lspe_ep_phase_kernel,
        out_shape=(jax.ShapeDtypeStruct((Ep, Hp), e_p.dtype),
                   jax.ShapeDtypeStruct((Np, Hp), f32)),
        grid=(T,),
        in_specs=[idx_spec, idx_spec, const_spec((2 * Np, Hp)),
                  const_spec((2 * Np, Hp)), tile_spec,
                  const_spec((Hp, Hp)), const_spec((1, Hp)), const_spec((1, Hp))],
        out_specs=(tile_spec, pl.BlockSpec((Np, Hp), lambda t: (0, 0))),
        compiler_params=cparams,
        cost_estimate=_cost(flops2, bytes2),
    )(send_row, recp_row, ab_e, ab_p, e_eu, fp["w_e_pm"], fp["b_eu"], fp["b_pm"])

    p_new = p_proj[:, 4 * Hp:5 * Hp] + p_agg @ fp["w_pu_agg"] + fp["b_pu"]
    return h_new[:N, :H], e_new[:E, :H], p_new[:N, :H]


def lspe_mpgnn_forward(h, e, p, edge_index, fused_params, *, force_blocked=False):
    N, H = h.shape
    E = e.shape[0]
    Hp = fused_params["w_hu_agg"].shape[0]
    Np = _round_up(N, _SUBLANES)
    Ep = _round_up(E, _EDGE_TILE)                # edges live on the lane axis

    send = edge_index[0].astype(jnp.int32)
    rec = edge_index[1].astype(jnp.int32)
    # Sentinel-padded index rows; recp already offset by Np for the combined mask.
    send_row = jnp.full((1, Ep), _SENT, jnp.int32).at[0, :E].set(send)
    recp_row = jnp.full((1, Ep), _SENT, jnp.int32).at[0, :E].set(rec + Np)

    h_p = _pad2(h, Np, Hp)
    e_p = _pad2(e, Ep, Hp)
    p_p = _pad2(p, Np, Hp)

    cap = _vmem_cap_bytes()
    budget = _single_shot_vmem_bytes(Np, Ep, Hp)
    if force_blocked or budget > cap:
        vmem_limit = int(min(cap, max(32 * 1024 * 1024,
                                      _blocked_vmem_bytes(Np, _EDGE_TILE, Hp))))
        return _forward_blocked(send_row, recp_row, h_p, e_p, p_p,
                                fused_params, vmem_limit, N, E, H)

    vmem_limit = int(min(cap, max(32 * 1024 * 1024, budget)))
    h_o, e_o, p_o = _forward_single_shot(send_row, recp_row, h_p, e_p, p_p,
                                         fused_params, vmem_limit)
    return h_o[:N, :H], e_o[:E, :H], p_o[:N, :H]


# -----------------------------------------------------------------------------
# Pure-JAX reference (mirrors the PyTorch module exactly) for verification.
# -----------------------------------------------------------------------------
def lspe_mpgnn_reference(h, e, p, edge_index, params):
    send, rec = edge_index[0], edge_index[1]

    def lin(name, x):
        return x @ params[name + "_w"].T + params[name + "_b"]

    N = h.shape[0]
    hp_send = jnp.concatenate([h[send], p[send]], axis=1)
    hp_rec = jnp.concatenate([h[rec], p[rec]], axis=1)
    h_messages = lin("h_message_mlp", jnp.concatenate([hp_send, hp_rec, e], axis=1))
    h_messages_agg = jax.ops.segment_sum(h_messages, rec, num_segments=N)
    h = lin("h_update", jnp.concatenate([h, h_messages_agg], axis=1))
    e = lin("e_update", jnp.concatenate([h[send], h[rec], e], axis=1))
    p_messages = lin("p_message_mlp", jnp.concatenate([p[send], p[rec], e], axis=1))
    p_messages_agg = jax.ops.segment_sum(p_messages, rec, num_segments=N)
    p = lin("p_update", jnp.concatenate([p, p_messages_agg], axis=1))
    return h, e, p


def init_params(key, num_hidden):
    """Deterministic init mimicking nn.Linear default: U(-1/sqrt(in), 1/sqrt(in))."""
    layers = {
        "h_message_mlp": 5 * num_hidden,
        "h_update": 2 * num_hidden,
        "e_update": 3 * num_hidden,
        "p_update": 2 * num_hidden,
        "p_message_mlp": 3 * num_hidden,
    }
    params = {}
    for name, fan_in in layers.items():
        key, kw, kb = jax.random.split(key, 3)
        bound = 1.0 / math.sqrt(fan_in)
        params[name + "_w"] = jax.random.uniform(
            kw, (num_hidden, fan_in), jnp.float32, -bound, bound)
        params[name + "_b"] = jax.random.uniform(
            kb, (num_hidden,), jnp.float32, -bound, bound)
    return params


if __name__ == "__main__":
    def run_case(num_nodes, num_edges, num_hidden, seed_key, force_blocked):
        k_h, k_e, k_p, k_s, k_r, k_w = jax.random.split(seed_key, 6)
        h = jax.random.normal(k_h, (num_nodes, num_hidden), jnp.float32)
        e = jax.random.normal(k_e, (num_edges, num_hidden), jnp.float32)
        p = jax.random.normal(k_p, (num_nodes, num_hidden), jnp.float32)
        send = jax.random.randint(k_s, (num_edges,), 0, num_nodes, jnp.int32)
        rec = jax.random.randint(k_r, (num_edges,), 0, num_nodes, jnp.int32)
        edge_index = jnp.stack([send, rec], axis=0)

        params = init_params(k_w, num_hidden)
        fused = prepare_fused_params(params, num_hidden)   # hoisted, once per layer

        outs = lspe_mpgnn_forward(h, e, p, edge_index, fused,
                                  force_blocked=force_blocked)
        jax.block_until_ready(outs)

        refs = lspe_mpgnn_reference(h, e, p, edge_index, params)
        for o, r in zip(outs, refs):
            np.testing.assert_allclose(np.asarray(o), np.asarray(r),
                                       rtol=1e-4, atol=1e-4)

    k1, k2 = jax.random.split(jax.random.PRNGKey(0))
    # Small graph -> single-shot fused kernel.
    run_case(8, 16, 32, k1, force_blocked=False)
    # Larger graph, forced through the edge-block grid path to exercise it.
    run_case(24, 300, 32, k2, force_blocked=True)

    print("KERNEL_OK")
</pallas_src>

<mosaic_0001>
module attributes {stable_mosaic.version = 11 : i64} {
  func.func @_lspe_single_shot_kernel(%arg0: memref<1x128xi32, #tpu.memory_space<vmem>>, %arg1: memref<1x128xi32, #tpu.memory_space<vmem>>, %arg2: memref<8x128xf32, #tpu.memory_space<vmem>>, %arg3: memref<128x128xf32, #tpu.memory_space<vmem>>, %arg4: memref<8x128xf32, #tpu.memory_space<vmem>>, %arg5: memref<128x384xf32, #tpu.memory_space<vmem>>, %arg6: memref<128x640xf32, #tpu.memory_space<vmem>>, %arg7: memref<128x256xf32, #tpu.memory_space<vmem>>, %arg8: memref<128x128xf32, #tpu.memory_space<vmem>>, %arg9: memref<128x256xf32, #tpu.memory_space<vmem>>, %arg10: memref<128x128xf32, #tpu.memory_space<vmem>>, %arg11: memref<128x128xf32, #tpu.memory_space<vmem>>, %arg12: memref<1x128xf32, #tpu.memory_space<vmem>>, %arg13: memref<1x128xf32, #tpu.memory_space<vmem>>, %arg14: memref<1x128xf32, #tpu.memory_space<vmem>>, %arg15: memref<1x128xf32, #tpu.memory_space<vmem>>, %arg16: memref<1x128xf32, #tpu.memory_space<vmem>>, %arg17: memref<8x128xf32, #tpu.memory_space<vmem>>, %arg18: memref<128x128xf32, #tpu.memory_space<vmem>>, %arg19: memref<8x128xf32, #tpu.memory_space<vmem>>) attributes {dimension_semantics = [], scalar_prefetch = 0 : i64, scratch_operands = 0 : i64, tpu.core_type = #tpu.core_type<tc>} {
    %c0 = arith.constant 0 : index
    %c0_0 = arith.constant 0 : index
    %0 = vector.load %arg0[%c0, %c0_0] : memref<1x128xi32, #tpu.memory_space<vmem>>, vector<1x128xi32>
    %c0_1 = arith.constant 0 : index
    %c0_2 = arith.constant 0 : index
    %1 = vector.load %arg1[%c0_1, %c0_2] : memref<1x128xi32, #tpu.memory_space<vmem>>, vector<1x128xi32>
    %2 = tpu.iota {dimensions = array<i32: 0>} : vector<16x128xi32>
    %3 = vector.broadcast %0 : vector<1x128xi32> to vector<16x128xi32>
    %4 = arith.cmpi eq, %2, %3 : vector<16x128xi32>
    %5 = vector.broadcast %1 : vector<1x128xi32> to vector<16x128xi32>
    %6 = arith.cmpi eq, %2, %5 : vector<16x128xi32>
    %7 = arith.ori %4, %6 : vector<16x128xi1>
    %8 = arith.extui %7 : vector<16x128xi1> to vector<16x128xi32>
    %9 = arith.sitofp %8 : vector<16x128xi32> to vector<16x128xf32>
    %10 = vector.extract_strided_slice %9 {offsets = [8, 0], sizes = [8, 128], strides = [1, 1]} : vector<16x128xf32> to vector<8x128xf32>
    %c0_3 = arith.constant 0 : index
    %c0_4 = arith.constant 0 : index
    %11 = vector.load %arg2[%c0_3, %c0_4] : memref<8x128xf32, #tpu.memory_space<vmem>>, vector<8x128xf32>
    %c0_5 = arith.constant 0 : index
    %c0_6 = arith.constant 0 : index
    %12 = vector.load %arg3[%c0_5, %c0_6] : memref<128x128xf32, #tpu.memory_space<vmem>>, vector<128x128xf32>
    %c0_7 = arith.constant 0 : index
    %c0_8 = arith.constant 0 : index
    %13 = vector.load %arg4[%c0_7, %c0_8] : memref<8x128xf32, #tpu.memory_space<vmem>>, vector<8x128xf32>
    %c0_9 = arith.constant 0 : index
    %c0_10 = arith.constant 0 : index
    %14 = vector.load %arg5[%c0_9, %c0_10] : memref<128x384xf32, #tpu.memory_space<vmem>>, vector<128x384xf32>
    %cst = arith.constant dense<0.000000e+00> : vector<8x384xf32>
    %15 = tpu.matmul %11, %14, %cst {dimension_numbers = #tpu.dot_dimension_numbers<[1], [0], [0], [1], [0, 0, 1, 1], [], []>} : vector<8x128xf32>, vector<128x384xf32>, vector<8x384xf32> -> vector<8x384xf32>
    %c0_11 = arith.constant 0 : index
    %c0_12 = arith.constant 0 : index
    %16 = vector.load %arg6[%c0_11, %c0_12] : memref<128x640xf32, #tpu.memory_space<vmem>>, vector<128x640xf32>
    %cst_13 = arith.constant dense<0.000000e+00> : vector<8x640xf32>
    %17 = tpu.matmul %13, %16, %cst_13 {dimension_numbers = #tpu.dot_dimension_numbers<[1], [0], [0], [1], [0, 0, 1, 1], [], []>} : vector<8x128xf32>, vector<128x640xf32>, vector<8x640xf32> -> vector<8x640xf32>
    %c0_14 = arith.constant 0 : index
    %c0_15 = arith.constant 0 : index
    %18 = vector.load %arg7[%c0_14, %c0_15] : memref<128x256xf32, #tpu.memory_space<vmem>>, vector<128x256xf32>
    %cst_16 = arith.constant dense<0.000000e+00> : vector<128x256xf32>
    %19 = tpu.matmul %12, %18, %cst_16 {dimension_numbers = #tpu.dot_dimension_numbers<[1], [0], [0], [1], [0, 0, 1, 1], [], []>} : vector<128x128xf32>, vector<128x256xf32>, vector<128x256xf32> -> vector<128x256xf32>
    %20 = vector.extract_strided_slice %15 {offsets = [0, 0], sizes = [8, 128], strides = [1, 1]} : vector<8x384xf32> to vector<8x128xf32>
    %21 = vector.extract_strided_slice %15 {offsets = [0, 128], sizes = [8, 128], strides = [1, 1]} : vector<8x384xf32> to vector<8x128xf32>
    %22 = vector.extract_strided_slice %15 {offsets = [0, 256], sizes = [8, 128], strides = [1, 1]} : vector<8x384xf32> to vector<8x128xf32>
    %23 = vector.extract_strided_slice %17 {offsets = [0, 0], sizes = [8, 128], strides = [1, 1]} : vector<8x640xf32> to vector<8x128xf32>
    %24 = vector.extract_strided_slice %17 {offsets = [0, 128], sizes = [8, 128], strides = [1, 1]} : vector<8x640xf32> to vector<8x128xf32>
    %25 = vector.extract_strided_slice %17 {offsets = [0, 256], sizes = [8, 128], strides = [1, 1]} : vector<8x640xf32> to vector<8x128xf32>
    %26 = vector.extract_strided_slice %17 {offsets = [0, 384], sizes = [8, 128], strides = [1, 1]} : vector<8x640xf32> to vector<8x128xf32>
    %27 = vector.extract_strided_slice %17 {offsets = [0, 512], sizes = [8, 128], strides = [1, 1]} : vector<8x640xf32> to vector<8x128xf32>
    %28 = vector.extract_strided_slice %19 {offsets = [0, 0], sizes = [128, 128], strides = [1, 1]} : vector<128x256xf32> to vector<128x128xf32>
    %29 = vector.extract_strided_slice %19 {offsets = [0, 128], sizes = [128, 128], strides = [1, 1]} : vector<128x256xf32> to vector<128x128xf32>
    %30 = arith.addf %20, %23 : vector<8x128xf32>
    %31 = arith.addf %21, %24 : vector<8x128xf32>
    %32 = tpu.concatenate %30, %31 in 0 : vector<8x128xf32>, vector<8x128xf32> -> vector<16x128xf32>
    %cst_17 = arith.constant dense<0.000000e+00> : vector<128x128xf32>
    %33 = tpu.matmul %9, %32, %cst_17 {dimension_numbers = #tpu.dot_dimension_numbers<[0], [0], [1], [1], [0, 1, 1, 1], [], []>} : vector<16x128xf32>, vector<16x128xf32>, vector<128x128xf32> -> vector<128x128xf32>
    %34 = arith.addf %33, %28 : vector<128x128xf32>
    %c0_18 = arith.constant 0 : index
    %c0_19 = arith.constant 0 : index
    %35 = vector.load %arg12[%c0_18, %c0_19] : memref<1x128xf32, #tpu.memory_space<vmem>>, vector<1x128xf32>
    %36 = vector.broadcast %35 : vector<1x128xf32> to vector<128x128xf32>
    %37 = arith.addf %34, %36 : vector<128x128xf32>
    %cst_20 = arith.constant dense<0.000000e+00> : vector<8x128xf32>
    %38 = tpu.matmul %10, %37, %cst_20 {dimension_numbers = #tpu.dot_dimension_numbers<[1], [0], [0], [1], [0, 0, 1, 1], [], []>} : vector<8x128xf32>, vector<128x128xf32>, vector<8x128xf32> -> vector<8x128xf32>
    %c0_21 = arith.constant 0 : index
    %c0_22 = arith.constant 0 : index
    %39 = vector.load %arg8[%c0_21, %c0_22] : memref<128x128xf32, #tpu.memory_space<vmem>>, vector<128x128xf32>
    %cst_23 = arith.constant dense<0.000000e+00> : vector<8x128xf32>
    %40 = tpu.matmul %38, %39, %cst_23 {dimension_numbers = #tpu.dot_dimension_numbers<[1], [0], [0], [1], [0, 0, 1, 1], [], []>} : vector<8x128xf32>, vector<128x128xf32>, vector<8x128xf32> -> vector<8x128xf32>
    %41 = arith.addf %22, %40 : vector<8x128xf32>
    %c0_24 = arith.constant 0 : index
    %c0_25 = arith.constant 0 : index
    %42 = vector.load %arg13[%c0_24, %c0_25] : memref<1x128xf32, #tpu.memory_space<vmem>>, vector<1x128xf32>
    %43 = vector.broadcast %42 : vector<1x128xf32> to vector<8x128xf32>
    %44 = arith.addf %41, %43 : vector<8x128xf32>
    %c0_26 = arith.constant 0 : index
    %c0_27 = arith.constant 0 : index
    %45 = vector.load %arg9[%c0_26, %c0_27] : memref<128x256xf32, #tpu.memory_space<vmem>>, vector<128x256xf32>
    %cst_28 = arith.constant dense<0.000000e+00> : vector<8x256xf32>
    %46 = tpu.matmul %44, %45, %cst_28 {dimension_numbers = #tpu.dot_dimension_numbers<[1], [0], [0], [1], [0, 0, 1, 1], [], []>} : vector<8x128xf32>, vector<128x256xf32>, vector<8x256xf32> -> vector<8x256xf32>
    %47 = vector.extract_strided_slice %46 {offsets = [0, 0], sizes = [8, 128], strides = [1, 1]} : vector<8x256xf32> to vector<8x128xf32>
    %48 = vector.extract_strided_slice %46 {offsets = [0, 128], sizes = [8, 128], strides = [1, 1]} : vector<8x256xf32> to vector<8x128xf32>
    %49 = tpu.concatenate %47, %48 in 0 : vector<8x128xf32>, vector<8x128xf32> -> vector<16x128xf32>
    %cst_29 = arith.constant dense<0.000000e+00> : vector<128x128xf32>
    %50 = tpu.matmul %9, %49, %cst_29 {dimension_numbers = #tpu.dot_dimension_numbers<[0], [0], [1], [1], [0, 1, 1, 1], [], []>} : vector<16x128xf32>, vector<16x128xf32>, vector<128x128xf32> -> vector<128x128xf32>
    %51 = arith.addf %50, %29 : vector<128x128xf32>
    %c0_30 = arith.constant 0 : index
    %c0_31 = arith.constant 0 : index
    %52 = vector.load %arg14[%c0_30, %c0_31] : memref<1x128xf32, #tpu.memory_space<vmem>>, vector<1x128xf32>
    %53 = vector.broadcast %52 : vector<1x128xf32> to vector<128x128xf32>
    %54 = arith.addf %51, %53 : vector<128x128xf32>
    %55 = tpu.concatenate %25, %26 in 0 : vector<8x128xf32>, vector<8x128xf32> -> vector<16x128xf32>
    %cst_32 = arith.constant dense<0.000000e+00> : vector<128x128xf32>
    %56 = tpu.matmul %9, %55, %cst_32 {dimension_numbers = #tpu.dot_dimension_numbers<[0], [0], [1], [1], [0, 1, 1, 1], [], []>} : vector<16x128xf32>, vector<16x128xf32>, vector<128x128xf32> -> vector<128x128xf32>
    %c0_33 = arith.constant 0 : index
    %c0_34 = arith.constant 0 : index
    %57 = vector.load %arg10[%c0_33, %c0_34] : memref<128x128xf32, #tpu.memory_space<vmem>>, vector<128x128xf32>
    %cst_35 = arith.constant dense<0.000000e+00> : vector<128x128xf32>
    %58 = tpu.matmul %54, %57, %cst_35 {dimension_numbers = #tpu.dot_dimension_numbers<[1], [0], [0], [1], [0, 0, 1, 1], [], []>} : vector<128x128xf32>, vector<128x128xf32>, vector<128x128xf32> -> vector<128x128xf32>
    %59 = arith.addf %56, %58 : vector<128x128xf32>
    %c0_36 = arith.constant 0 : index
    %c0_37 = arith.constant 0 : index
    %60 = vector.load %arg15[%c0_36, %c0_37] : memref<1x128xf32, #tpu.memory_space<vmem>>, vector<1x128xf32>
    %61 = vector.broadcast %60 : vector<1x128xf32> to vector<128x128xf32>
    %62 = arith.addf %59, %61 : vector<128x128xf32>
    %cst_38 = arith.constant dense<0.000000e+00> : vector<8x128xf32>
    %63 = tpu.matmul %10, %62, %cst_38 {dimension_numbers = #tpu.dot_dimension_numbers<[1], [0], [0], [1], [0, 0, 1, 1], [], []>} : vector<8x128xf32>, vector<128x128xf32>, vector<8x128xf32> -> vector<8x128xf32>
    %c0_39 = arith.constant 0 : index
    %c0_40 = arith.constant 0 : index
    %64 = vector.load %arg11[%c0_39, %c0_40] : memref<128x128xf32, #tpu.memory_space<vmem>>, vector<128x128xf32>
    %cst_41 = arith.constant dense<0.000000e+00> : vector<8x128xf32>
    %65 = tpu.matmul %63, %64, %cst_41 {dimension_numbers = #tpu.dot_dimension_numbers<[1], [0], [0], [1], [0, 0, 1, 1], [], []>} : vector<8x128xf32>, vector<128x128xf32>, vector<8x128xf32> -> vector<8x128xf32>
    %66 = arith.addf %27, %65 : vector<8x128xf32>
    %c0_42 = arith.constant 0 : index
    %c0_43 = arith.constant 0 : index
    %67 = vector.load %arg16[%c0_42, %c0_43] : memref<1x128xf32, #tpu.memory_space<vmem>>, vector<1x128xf32>
    %68 = vector.broadcast %67 : vector<1x128xf32> to vector<8x128xf32>
    %69 = arith.addf %66, %68 : vector<8x128xf32>
    %c0_44 = arith.constant 0 : index
    %c0_45 = arith.constant 0 : index
    %70 = vector.load %arg17[%c0_44, %c0_45] : memref<8x128xf32, #tpu.memory_space<vmem>>, vector<8x128xf32>
    tpu.vector_store %arg17[%c0_44, %c0_45], %44 {strides = array<i32>} : memref<8x128xf32, #tpu.memory_space<vmem>>, vector<8x128xf32>,
    %c0_46 = arith.constant 0 : index
    %c0_47 = arith.constant 0 : index
    %71 = vector.load %arg18[%c0_46, %c0_47] : memref<128x128xf32, #tpu.memory_space<vmem>>, vector<128x128xf32>
    tpu.vector_store %arg18[%c0_46, %c0_47], %54 {strides = array<i32>} : memref<128x128xf32, #tpu.memory_space<vmem>>, vector<128x128xf32>,
    %c0_48 = arith.constant 0 : index
    %c0_49 = arith.constant 0 : index
    %72 = vector.load %arg19[%c0_48, %c0_49] : memref<8x128xf32, #tpu.memory_space<vmem>>, vector<8x128xf32>
    tpu.vector_store %arg19[%c0_48, %c0_49], %69 {strides = array<i32>} : memref<8x128xf32, #tpu.memory_space<vmem>>, vector<8x128xf32>,
    return
  }
}

</mosaic_0001>

<llo_original>
// kernel: tpu_custom_call.1
$region0: #{tpu_custom_call.1}
  #allocation0 [shape = 'u32[]', space=smem, size = 0x4, offset = 0x4, fixed_abs, tag = 'smem constant byte address 0x4 - core index']
  #allocation1 [shape = 'u32[144,128]{1,0:T(1,128)}', space=vmem, size = 0x12000, scoped, tag = 'internal scratch']
  %s0 = inlined_call_operand.hbm [shape: s32[1,128], index: 0, kind: input, shape index: {}]
  %s1 = inlined_call_operand.vmem [shape: s32[1,128], index: 1, kind: input, shape index: {}]
  %s2 = inlined_call_operand.hbm [shape: f32[8,128], index: 2, kind: input, shape index: {}]
  %s3 = inlined_call_operand.hbm [shape: f32[128,128], index: 3, kind: input, shape index: {}]
  %s4 = inlined_call_operand.vmem [shape: f32[8,128], index: 4, kind: input, shape index: {}]
  %s5 = inlined_call_operand.hbm [shape: f32[128,384], index: 5, kind: input, shape index: {}]
  %s6 = inlined_call_operand.hbm [shape: f32[128,640], index: 6, kind: input, shape index: {}]
  %s7 = inlined_call_operand.hbm [shape: f32[128,256], index: 7, kind: input, shape index: {}]
  %s8 = inlined_call_operand.hbm [shape: f32[128,128], index: 8, kind: input, shape index: {}]
  %s9 = inlined_call_operand.hbm [shape: f32[128,256], index: 9, kind: input, shape index: {}]
  %s10 = inlined_call_operand.hbm [shape: f32[128,128], index: 10, kind: input, shape index: {}]
  %s11 = inlined_call_operand.hbm [shape: f32[128,128], index: 11, kind: input, shape index: {}]
  %s12 = inlined_call_operand.vmem [shape: f32[1,128], index: 12, kind: input, shape index: {}]
  %s13 = inlined_call_operand.vmem [shape: f32[1,128], index: 13, kind: input, shape index: {}]
  %s14 = inlined_call_operand.vmem [shape: f32[1,128], index: 14, kind: input, shape index: {}]
  %s15 = inlined_call_operand.vmem [shape: f32[1,128], index: 15, kind: input, shape index: {}]
  %s16 = inlined_call_operand.vmem [shape: f32[1,128], index: 16, kind: input, shape index: {}]
  %s17 = inlined_call_operand.hbm [shape: f32[8,128], index: 17, kind: output, shape index: {0}]
  %s18 = inlined_call_operand.hbm [shape: f32[128,128], index: 18, kind: output, shape index: {1}]
  %s19 = inlined_call_operand.hbm [shape: f32[8,128], index: 19, kind: output, shape index: {2}]
  %20 = xla_tuple %s17, %s18, %s19
  %s21 = sld [smem:[#allocation0]]
  $region134: #{tpu_custom_call.1} parent=0
    _
  %s23 = ssub.s32 1, %s21
  %s24 = scalar_select 0, %s23, %s21
  $region1: #{tpu_custom_call.1} parent=0
    #allocation2 [shape = 'u8[512]{0}', space=vmem, size = 0x400, scoped, tag = 'input window, operand 0, single buffered']
    #allocation3 [shape = 's32[1]{0}', space=sflag, size = 0x4, scoped, tag = 'scoped memory for tpu_custom_call.1']
    #allocation4 [shape = 's32[1]{0}', space=sflag, size = 0x4, scoped, tag = 'scoped memory for tpu_custom_call.1']
    #allocation5 [shape = 'u8[4096]{0}', space=vmem, size = 0x1000, scoped, tag = 'input window, operand 2, single buffered']
    #allocation6 [shape = 's32[1]{0}', space=sflag, size = 0x4, scoped, tag = 'scoped memory for tpu_custom_call.1']
    #allocation7 [shape = 'u8[65536]{0}', space=vmem, size = 0x10000, scoped, tag = 'input window, operand 3, single buffered']
    #allocation8 [shape = 'u8[196608]{0}', space=vmem, size = 0x30000, scoped, tag = 'input window, operand 5, single buffered']
    #allocation9 [shape = 's32[1]{0}', space=sflag, size = 0x4, scoped, tag = 'scoped memory for tpu_custom_call.1']
    #allocation10 [shape = 'u8[327680]{0}', space=vmem, size = 0x50000, scoped, tag = 'input window, operand 6, single buffered']
    #allocation11 [shape = 'u8[131072]{0}', space=vmem, size = 0x20000, scoped, tag = 'input window, operand 7, single buffered']
    #allocation12 [shape = 's32[1]{0}', space=sflag, size = 0x4, scoped, tag = 'scoped memory for tpu_custom_call.1']
    #allocation13 [shape = 'u8[65536]{0}', space=vmem, size = 0x10000, scoped, tag = 'input window, operand 8, single buffered']
    #allocation14 [shape = 'u8[131072]{0}', space=vmem, size = 0x20000, scoped, tag = 'input window, operand 9, single buffered']
    #allocation15 [shape = 's32[1]{0}', space=sflag, size = 0x4, scoped, tag = 'scoped memory for tpu_custom_call.1']
    #allocation16 [shape = 'u8[65536]{0}', space=vmem, size = 0x10000, scoped, tag = 'input window, operand 10, single buffered']
    #allocation17 [shape = 'u8[65536]{0}', space=vmem, size = 0x10000, scoped, tag = 'input window, operand 11, single buffered']
    #allocation18 [shape = 's32[1]{0}', space=sflag, size = 0x4, scoped, tag = 'scoped memory for tpu_custom_call.1']
    #allocation19 [shape = 'u8[4096]{0}', space=vmem, size = 0x1000, scoped, tag = 'output window, operand 0, single buffered']
    #allocation20 [shape = 'u8[65536]{0}', space=vmem, size = 0x10000, scoped, tag = 'output window, operand 1, single buffered']
    #allocation21 [shape = 's32[1]{0}', space=sflag, size = 0x4, scoped, tag = 'scoped memory for tpu_custom_call.1']
    #allocation22 [shape = 'u8[4096]{0}', space=vmem, size = 0x1000, scoped, tag = 'output window, operand 2, single buffered']
    %25 = vsyncpa [#allocation3], 0
    %26 = vsyncpa [#allocation6], 0
    %27 = vsyncpa [#allocation9], 0
    %28 = vsyncpa [#allocation12], 0
    %29 = vsyncpa [#allocation15], 0
    %30 = vsyncpa [#allocation18], 0
    %31 = vsyncpa [#allocation4], 0
    %32 = vsyncpa [#allocation21], 0
    // Predicated region
    $region2: #{tpu_custom_call.1} parent=1 // pred_check
      _
    $region3: #{tpu_custom_call.1} parent=1 // pred_check_branch
      %34 = sbr.rel (0) target = $region5
    $region4: #{tpu_custom_call.1} parent=1 // pred_region
      %s36 = ssub.s32 16, 16
      %37 = vsyncadd [#allocation3], %s36
      %s39 = sshll.u32 [#allocation2], 4
      %s40 = int_to_ptr.vmem [resolvable:$true] %s39
      %42 = dma.hbm_to_vmem [thread:$0]  %s0, 16, %s40, [#allocation3]
    $region5: #{tpu_custom_call.1} parent=1 // pred_fallthru
      _
    // Predicated region
    $region6: #{tpu_custom_call.1} parent=1 // pred_check
      _
    $region7: #{tpu_custom_call.1} parent=1 // pred_check_branch
      %44 = sbr.rel (0) target = $region9
    $region8: #{tpu_custom_call.1} parent=1 // pred_region
      _
    $region9: #{tpu_custom_call.1} parent=1 // pred_fallthru
      _
    // Predicated region
    $region10: #{tpu_custom_call.1} parent=1 // pred_check
      _
    $region11: #{tpu_custom_call.1} parent=1 // pred_check_branch
      %46 = sbr.rel (0) target = $region13
    $region12: #{tpu_custom_call.1} parent=1 // pred_region
      %s48 = ssub.s32 128, 128
      %49 = vsyncadd [#allocation6], %s48
      %s51 = sshll.u32 [#allocation5], 4
      %s52 = int_to_ptr.vmem [resolvable:$true] %s51
      %54 = dma.hbm_to_vmem [thread:$0]  %s2, 128, %s52, [#allocation6]
    $region13: #{tpu_custom_call.1} parent=1 // pred_fallthru
      _
    // Predicated region
    $region14: #{tpu_custom_call.1} parent=1 // pred_check
      _
    $region15: #{tpu_custom_call.1} parent=1 // pred_check_branch
      %56 = sbr.rel (0) target = $region17
    $region16: #{tpu_custom_call.1} parent=1 // pred_region
      %s58 = ssub.s32 2048, 2048
      %59 = vsyncadd [#allocation6], %s58
      %s60 = sshll.u32 [#allocation7], 4
      %s61 = int_to_ptr.vmem [resolvable:$true] %s60
      %66 = dma.hbm_to_vmem [thread:$0]  %s3, 2048, %s61, [#allocation6], 128, 128, 8
    $region17: #{tpu_custom_call.1} parent=1 // pred_fallthru
      _
    // Predicated region
    $region18: #{tpu_custom_call.1} parent=1 // pred_check
      _
    $region19: #{tpu_custom_call.1} parent=1 // pred_check_branch
      %68 = sbr.rel (0) target = $region21
    $region20: #{tpu_custom_call.1} parent=1 // pred_region
      _
    $region21: #{tpu_custom_call.1} parent=1 // pred_fallthru
      _
    // Predicated region
    $region22: #{tpu_custom_call.1} parent=1 // pred_check
      _
    $region23: #{tpu_custom_call.1} parent=1 // pred_check_branch
      %70 = sbr.rel (0) target = $region25
    $region24: #{tpu_custom_call.1} parent=1 // pred_region
      %s72 = ssub.s32 6144, 6144
      %73 = vsyncadd [#allocation9], %s72
      %s74 = sshll.u32 [#allocation8], 4
      %s75 = int_to_ptr.vmem [resolvable:$true] %s74
      %80 = dma.hbm_to_vmem [thread:$0]  %s5, 6144, %s75, [#allocation9], 384, 384, 24
    $region25: #{tpu_custom_call.1} parent=1 // pred_fallthru
      _
    // Predicated region
    $region26: #{tpu_custom_call.1} parent=1 // pred_check
      _
    $region27: #{tpu_custom_call.1} parent=1 // pred_check_branch
      %82 = sbr.rel (0) target = $region29
    $region28: #{tpu_custom_call.1} parent=1 // pred_region
      %s84 = ssub.s32 10240, 10240
      %85 = vsyncadd [#allocation9], %s84
      %s86 = sshll.u32 [#allocation10], 4
      %s87 = int_to_ptr.vmem [resolvable:$true] %s86
      %92 = dma.hbm_to_vmem [thread:$0]  %s6, 10240, %s87, [#allocation9], 640, 640, 40
    $region29: #{tpu_custom_call.1} parent=1 // pred_fallthru
      _
    // Predicated region
    $region30: #{tpu_custom_call.1} parent=1 // pred_check
      _
    $region31: #{tpu_custom_call.1} parent=1 // pred_check_branch
      %94 = sbr.rel (0) target = $region33
    $region32: #{tpu_custom_call.1} parent=1 // pred_region
      %s96 = ssub.s32 4096, 4096
      %97 = vsyncadd [#allocation12], %s96
      %s98 = sshll.u32 [#allocation11], 4
      %s99 = int_to_ptr.vmem [resolvable:$true] %s98
      %104 = dma.hbm_to_vmem [thread:$0]  %s7, 4096, %s99, [#allocation12], 256, 256, 16
    $region33: #{tpu_custom_call.1} parent=1 // pred_fallthru
      _
    // Predicated region
    $region34: #{tpu_custom_call.1} parent=1 // pred_check
      _
    $region35: #{tpu_custom_call.1} parent=1 // pred_check_branch
      %106 = sbr.rel (0) target = $region37
    $region36: #{tpu_custom_call.1} parent=1 // pred_region
      %s108 = ssub.s32 2048, 2048
      %109 = vsyncadd [#allocation12], %s108
      %s110 = sshll.u32 [#allocation13], 4
      %s111 = int_to_ptr.vmem [resolvable:$true] %s110
      %116 = dma.hbm_to_vmem [thread:$0]  %s8, 2048, %s111, [#allocation12], 128, 128, 8
    $region37: #{tpu_custom_call.1} parent=1 // pred_fallthru
      _
    // Predicated region
    $region38: #{tpu_custom_call.1} parent=1 // pred_check
      _
    $region39: #{tpu_custom_call.1} parent=1 // pred_check_branch
      %118 = sbr.rel (0) target = $region41
    $region40: #{tpu_custom_call.1} parent=1 // pred_region
      %s120 = ssub.s32 4096, 4096
      %121 = vsyncadd [#allocation15], %s120
      %s122 = sshll.u32 [#allocation14], 4
      %s123 = int_to_ptr.vmem [resolvable:$true] %s122
      %128 = dma.hbm_to_vmem [thread:$0]  %s9, 4096, %s123, [#allocation15], 256, 256, 16
    $region41: #{tpu_custom_call.1} parent=1 // pred_fallthru
      _
    // Predicated region
    $region42: #{tpu_custom_call.1} parent=1 // pred_check
      _
    $region43: #{tpu_custom_call.1} parent=1 // pred_check_branch
      %130 = sbr.rel (0) target = $region45
    $region44: #{tpu_custom_call.1} parent=1 // pred_region
      %s132 = ssub.s32 2048, 2048
      %133 = vsyncadd [#allocation15], %s132
      %s134 = sshll.u32 [#allocation16], 4
      %s135 = int_to_ptr.vmem [resolvable:$true] %s134
      %140 = dma.hbm_to_vmem [thread:$0]  %s10, 2048, %s135, [#allocation15], 128, 128, 8
    $region45: #{tpu_custom_call.1} parent=1 // pred_fallthru
      _
    // Predicated region
    $region46: #{tpu_custom_call.1} parent=1 // pred_check
      _
    $region47: #{tpu_custom_call.1} parent=1 // pred_check_branch
      %142 = sbr.rel (0) target = $region49
    $region48: #{tpu_custom_call.1} parent=1 // pred_region
      %s144 = ssub.s32 2048, 2048
      %145 = vsyncadd [#allocation18], %s144
      %s146 = sshll.u32 [#allocation17], 4
      %s147 = int_to_ptr.vmem [resolvable:$true] %s146
      %152 = dma.hbm_to_vmem [thread:$0]  %s11, 2048, %s147, [#allocation18], 128, 128, 8
    $region49: #{tpu_custom_call.1} parent=1 // pred_fallthru
      _
    // Predicated region
    $region50: #{tpu_custom_call.1} parent=1 // pred_check
      _
    $region51: #{tpu_custom_call.1} parent=1 // pred_check_branch
      %154 = sbr.rel (0) target = $region53
    $region52: #{tpu_custom_call.1} parent=1 // pred_region
      _
    $region53: #{tpu_custom_call.1} parent=1 // pred_fallthru
      _
    // Predicated region
    $region54: #{tpu_custom_call.1} parent=1 // pred_check
      _
    $region55: #{tpu_custom_call.1} parent=1 // pred_check_branch
      %156 = sbr.rel (0) target = $region57
    $region56: #{tpu_custom_call.1} parent=1 // pred_region
      _
    $region57: #{tpu_custom_call.1} parent=1 // pred_fallthru
      _
    // Predicated region
    $region58: #{tpu_custom_call.1} parent=1 // pred_check
      _
    $region59: #{tpu_custom_call.1} parent=1 // pred_check_branch
      %158 = sbr.rel (0) target = $region61
    $region60: #{tpu_custom_call.1} parent=1 // pred_region
      _
    $region61: #{tpu_custom_call.1} parent=1 // pred_fallthru
      _
    // Predicated region
    $region62: #{tpu_custom_call.1} parent=1 // pred_check
      _
    $region63: #{tpu_custom_call.1} parent=1 // pred_check_branch
      %160 = sbr.rel (0) target = $region65
    $region64: #{tpu_custom_call.1} parent=1 // pred_region
      _
    $region65: #{tpu_custom_call.1} parent=1 // pred_fallthru
      _
    // Predicated region
    $region66: #{tpu_custom_call.1} parent=1 // pred_check
      _
    $region67: #{tpu_custom_call.1} parent=1 // pred_check_branch
      %162 = sbr.rel (0) target = $region69
    $region68: #{tpu_custom_call.1} parent=1 // pred_region
      _
    $region69: #{tpu_custom_call.1} parent=1 // pred_fallthru
      _
    // Predicated region
    $region70: #{tpu_custom_call.1} parent=1 // pred_check
      _
    $region71: #{tpu_custom_call.1} parent=1 // pred_check_branch
      %164 = sbr.rel (0) target = $region73
    $region72: #{tpu_custom_call.1} parent=1 // pred_region
      %165 = dma.done [#allocation3], 16
    $region73: #{tpu_custom_call.1} parent=1 // pred_fallthru
      _
    // Predicated region
    $region74: #{tpu_custom_call.1} parent=1 // pred_check
      _
    $region75: #{tpu_custom_call.1} parent=1 // pred_check_branch
      %167 = sbr.rel (0) target = $region77
    $region76: #{tpu_custom_call.1} parent=1 // pred_region
      %168 = dma.done [#allocation6], 128
    $region77: #{tpu_custom_call.1} parent=1 // pred_fallthru
      _
    // Predicated region
    $region78: #{tpu_custom_call.1} parent=1 // pred_check
      _
    $region79: #{tpu_custom_call.1} parent=1 // pred_check_branch
      %170 = sbr.rel (0) target = $region81
    $region80: #{tpu_custom_call.1} parent=1 // pred_region
      %171 = dma.done [#allocation6], 2048
    $region81: #{tpu_custom_call.1} parent=1 // pred_fallthru
      _
    // Predicated region
    $region82: #{tpu_custom_call.1} parent=1 // pred_check
      _
    $region83: #{tpu_custom_call.1} parent=1 // pred_check_branch
      %173 = sbr.rel (0) target = $region85
    $region84: #{tpu_custom_call.1} parent=1 // pred_region
      %174 = dma.done [#allocation9], 6144
    $region85: #{tpu_custom_call.1} parent=1 // pred_fallthru
      _
    // Predicated region
    $region86: #{tpu_custom_call.1} parent=1 // pred_check
      _
    $region87: #{tpu_custom_call.1} parent=1 // pred_check_branch
      %176 = sbr.rel (0) target = $region89
    $region88: #{tpu_custom_call.1} parent=1 // pred_region
      %177 = dma.done [#allocation9], 10240
    $region89: #{tpu_custom_call.1} parent=1 // pred_fallthru
      _
    // Predicated region
    $region90: #{tpu_custom_call.1} parent=1 // pred_check
      _
    $region91: #{tpu_custom_call.1} parent=1 // pred_check_branch
      %179 = sbr.rel (0) target = $region93
    $region92: #{tpu_custom_call.1} parent=1 // pred_region
      %180 = dma.done [#allocation12], 4096
    $region93: #{tpu_custom_call.1} parent=1 // pred_fallthru
      _
    // Predicated region
    $region94: #{tpu_custom_call.1} parent=1 // pred_check
      _
    $region95: #{tpu_custom_call.1} parent=1 // pred_check_branch
      %182 = sbr.rel (0) target = $region97
    $region96: #{tpu_custom_call.1} parent=1 // pred_region
      %183 = dma.done [#allocation12], 2048
    $region97: #{tpu_custom_call.1} parent=1 // pred_fallthru
      _
    // Predicated region
    $region98: #{tpu_custom_call.1} parent=1 // pred_check
      _
    $region99: #{tpu_custom_call.1} parent=1 // pred_check_branch
      %185 = sbr.rel (0) target = $region101
    $region100: #{tpu_custom_call.1} parent=1 // pred_region
      %186 = dma.done [#allocation15], 4096
    $region101: #{tpu_custom_call.1} parent=1 // pred_fallthru
      _
    // Predicated region
    $region102: #{tpu_custom_call.1} parent=1 // pred_check
      _
    $region103: #{tpu_custom_call.1} parent=1 // pred_check_branch
      %188 = sbr.rel (0) target = $region105
    $region104: #{tpu_custom_call.1} parent=1 // pred_region
      %189 = dma.done [#allocation15], 2048
    $region105: #{tpu_custom_call.1} parent=1 // pred_fallthru
      _
    // Predicated region
    $region106: #{tpu_custom_call.1} parent=1 // pred_check
      _
    $region107: #{tpu_custom_call.1} parent=1 // pred_check_branch
      %191 = sbr.rel (0) target = $region109
    $region108: #{tpu_custom_call.1} parent=1 // pred_region
      %192 = dma.done [#allocation18], 2048
    $region109: #{tpu_custom_call.1} parent=1 // pred_fallthru
      _
    %v193 = vld [vmem:[#allocation2] sm:$0x1]
    %v194 = vld [vmem:[%s1] sm:$0x1]
    %v195 = vlaneseq
    %v196 = vshrl.u32 %v195, 7
    %v197 = vadd.s32 %v196, 8
    %v198 = vlaneseq
    %v199 = vshrl.u32 %v198, 7
    %v200 = vsub.s32 0, %v199
    %v201 = vrot.slane %v193, %v200
    %vm202 = vcmp.eq.s32.totalorder %v196, %v201
    %vm203 = vcmp.eq.s32.totalorder %v197, %v201
    %v204 = vlaneseq
    %v205 = vshrl.u32 %v204, 7
    %v206 = vsub.s32 0, %v205
    %v207 = vrot.slane %v194, %v206
    %vm208 = vcmp.eq.s32.totalorder %v196, %v207
    %vm209 = vcmp.eq.s32.totalorder %v197, %v207
    %vm210 = vmor %vm202, %vm208
    %vm211 = vmor %vm203, %vm209
    %v212 = vsel %vm210, 1, 0
    %v213 = vsel %vm211, 1, 0
    %v214 = vcvt.s32.f32 %v212
    %v215 = vcvt.s32.f32 %v213
    %v216 = vld [vmem:[#allocation5] sm:$0xff]
    %v217 = vld [vmem:[#allocation7] sm:$0xff]
    %v218 = vld [vmem:[#allocation7 + $0x8] sm:$0xff]
    %v219 = vld [vmem:[#allocation7 + $0x10] sm:$0xff]
    %v220 = vld [vmem:[#allocation7 + $0x18] sm:$0xff]
    %v221 = vld [vmem:[#allocation7 + $0x20] sm:$0xff]
    %v222 = vld [vmem:[#allocation7 + $0x28] sm:$0xff]
    %v223 = vld [vmem:[#allocation7 + $0x30] sm:$0xff]
    %v224 = vld [vmem:[#allocation7 + $0x38] sm:$0xff]
    %v225 = vld [vmem:[#allocation7 + $0x40] sm:$0xff]
    %v226 = vld [vmem:[#allocation7 + $0x48] sm:$0xff]
    %v227 = vld [vmem:[#allocation7 + $0x50] sm:$0xff]
    %v228 = vld [vmem:[#allocation7 + $0x58] sm:$0xff]
    %v229 = vld [vmem:[#allocation7 + $0x60] sm:$0xff]
    %v230 = vld [vmem:[#allocation7 + $0x68] sm:$0xff]
    %v231 = vld [vmem:[#allocation7 + $0x70] sm:$0xff]
    %v232 = vld [vmem:[#allocation7 + $0x78] sm:$0xff]
    %v233 = vld [vmem:[%s4] sm:$0xff]
    %v234 = vld [vmem:[#allocation8] sm:$0xff]
    %v235 = vld [vmem:[#allocation8 + $0x8] sm:$0xff]
    %v236 = vld [vmem:[#allocation8 + $0x10] sm:$0xff]
    %v237 = vld [vmem:[#allocation8 + $0x18] sm:$0xff]
    %v238 = vld [vmem:[#allocation8 + $0x20] sm:$0xff]
    %v239 = vld [vmem:[#allocation8 + $0x28] sm:$0xff]
    %v240 = vld [vmem:[#allocation8 + $0x30] sm:$0xff]
    %v241 = vld [vmem:[#allocation8 + $0x38] sm:$0xff]
    %v242 = vld [vmem:[#allocation8 + $0x40] sm:$0xff]
    %v243 = vld [vmem:[#allocation8 + $0x48] sm:$0xff]
    %v244 = vld [vmem:[#allocation8 + $0x50] sm:$0xff]
    %v245 = vld [vmem:[#allocation8 + $0x58] sm:$0xff]
    %v246 = vld [vmem:[#allocation8 + $0x60] sm:$0xff]
    %v247 = vld [vmem:[#allocation8 + $0x68] sm:$0xff]
    %v248 = vld [vmem:[#allocation8 + $0x70] sm:$0xff]
    %v249 = vld [vmem:[#allocation8 + $0x78] sm:$0xff]
    %v250 = vld [vmem:[#allocation8 + $0x80] sm:$0xff]
    %v251 = vld [vmem:[#allocation8 + $0x88] sm:$0xff]
    %v252 = vld [vmem:[#allocation8 + $0x90] sm:$0xff]
    %v253 = vld [vmem:[#allocation8 + $0x98] sm:$0xff]
    %v254 = vld [vmem:[#allocation8 + $0xa0] sm:$0xff]
    %v255 = vld [vmem:[#allocation8 + $0xa8] sm:$0xff]
    %v256 = vld [vmem:[#allocation8 + $0xb0] sm:$0xff]
    %v257 = vld [vmem:[#allocation8 + $0xb8] sm:$0xff]
    %v258 = vld [vmem:[#allocation8 + $0xc0] sm:$0xff]
    %v259 = vld [vmem:[#allocation8 + $0xc8] sm:$0xff]
    %v260 = vld [vmem:[#allocation8 + $0xd0] sm:$0xff]
    %v261 = vld [vmem:[#allocation8 + $0xd8] sm:$0xff]
    %v262 = vld [vmem:[#allocation8 + $0xe0] sm:$0xff]
    %v263 = vld [vmem:[#allocation8 + $0xe8] sm:$0xff]
    %v264 = vld [vmem:[#allocation8 + $0xf0] sm:$0xff]
    %v265 = vld [vmem:[#allocation8 + $0xf8] sm:$0xff]
    %v266 = vld [vmem:[#allocation8 + $0x100] sm:$0xff]
    %v267 = vld [vmem:[#allocation8 + $0x108] sm:$0xff]
    %v268 = vld [vmem:[#allocation8 + $0x110] sm:$0xff]
    %v269 = vld [vmem:[#allocation8 + $0x118] sm:$0xff]
    %v270 = vld [vmem:[#allocation8 + $0x120] sm:$0xff]
    %v271 = vld [vmem:[#allocation8 + $0x128] sm:$0xff]
    %v272 = vld [vmem:[#allocation8 + $0x130] sm:$0xff]
    %v273 = vld [vmem:[#allocation8 + $0x138] sm:$0xff]
    %v274 = vld [vmem:[#allocation8 + $0x140] sm:$0xff]
    %v275 = vld [vmem:[#allocation8 + $0x148] sm:$0xff]
    %v276 = vld [vmem:[#allocation8 + $0x150] sm:$0xff]
    %v277 = vld [vmem:[#allocation8 + $0x158] sm:$0xff]
    %v278 = vld [vmem:[#allocation8 + $0x160] sm:$0xff]
    %v279 = vld [vmem:[#allocation8 + $0x168] sm:$0xff]
    %v280 = vld [vmem:[#allocation8 + $0x170] sm:$0xff]
    %v281 = vld [vmem:[#allocation8 + $0x178] sm:$0xff]
    %282 = vmatprep.subr.mxu0 %v235
    %283 = vmatpush1.msra.mxu0 %v234
    %284 = vmatprep.subr.mxu0 %v238
    %285 = vmatpush1.msra.mxu0 %v237
    %286 = vmatprep.subr.mxu0 %v241
    %287 = vmatpush1.msra.mxu0 %v240
    %288 = vmatprep.subr.mxu0 %v244
    %289 = vmatpush1.msra.mxu0 %v243
    %290 = vmatprep.subr.mxu0 %v247
    %291 = vmatpush1.msra.mxu0 %v246
    %292 = vmatprep.subr.mxu0 %v250
    %293 = vmatpush1.msra.mxu0 %v249
    %294 = vmatprep.subr.mxu0 %v253
    %295 = vmatpush1.msra.mxu0 %v252
    %296 = vmatprep.subr.mxu0 %v256
    %297 = vmatpush1.msra.mxu0 %v255
    %298 = vmatprep.subr.mxu0 %v259
    %299 = vmatpush1.msra.mxu0 %v258
    %300 = vmatprep.subr.mxu0 %v262
    %301 = vmatpush1.msra.mxu0 %v261
    %302 = vmatprep.subr.mxu0 %v265
    %303 = vmatpush1.msra.mxu0 %v264
    %304 = vmatprep.subr.mxu0 %v268
    %305 = vmatpush1.msra.mxu0 %v267
    %306 = vmatprep.subr.mxu0 %v271
    %307 = vmatpush1.msra.mxu0 %v270
    %308 = vmatprep.subr.mxu0 %v274
    %309 = vmatpush1.msra.mxu0 %v273
    %310 = vmatprep.subr.mxu0 %v277
    %311 = vmatpush1.msra.mxu0 %v276
    %312 = vmatprep.subr.mxu0 %v280
    %313 = vmatpush1.msra.mxu0 %v279
    %314 = vmatprep.subr.mxu0 0.0
    %315 = vmatpush1.msra.mxu0 0.0
    %316 = vmatprep.subr.mxu0 0.0
    %317 = vmatpush1.msra.mxu0 0.0
    %318 = vmatprep.subr.mxu0 0.0
    %319 = vmatpush1.msra.mxu0 0.0
    %320 = vmatprep.subr.mxu0 0.0
    %321 = vmatpush1.msra.mxu0 0.0
    %322 = vmatprep.subr.mxu0 0.0
    %323 = vmatpush1.msra.mxu0 0.0
    %324 = vmatprep.subr.mxu0 0.0
    %325 = vmatpush1.msra.mxu0 0.0
    %326 = vmatprep.subr.mxu0 0.0
    %327 = vmatpush1.msra.mxu0 0.0
    %328 = vmatprep.subr.mxu0 0.0
    %329 = vmatpush1.msra.mxu0 0.0
    %330 = vmatprep.subr.mxu0 0.0
    %331 = vmatpush1.msra.mxu0 0.0
    %332 = vmatprep.subr.mxu0 0.0
    %333 = vmatpush1.msra.mxu0 0.0
    %334 = vmatprep.subr.mxu0 0.0
    %335 = vmatpush1.msra.mxu0 0.0
    %336 = vmatprep.subr.mxu0 0.0
    %337 = vmatpush1.msra.mxu0 0.0
    %338 = vmatprep.subr.mxu0 0.0
    %339 = vmatpush1.msra.mxu0 0.0
    %340 = vmatprep.subr.mxu0 0.0
    %341 = vmatpush1.msra.mxu0 0.0
    %342 = vmatprep.subr.mxu0 0.0
    %343 = vmatpush1.msra.mxu0 0.0
    %344 = vmatprep.subr.mxu0 0.0
    %345 = vmatpush1.msra.mxu0 0.0
    %346 = vmatprep.mubr.f32.mxu0 0.0
    %347 = vmatmul.mubr.f32.gmra.mrb[0].mxu0 %v216
    %v348 = vpop.f32.mrb[0].mxu0
    %v349 = vadd.f32 0.0, %v348
    %v350 = vpop.f32.mrb[0].mxu0
    %v351 = vadd.f32 0.0, %v350
    %352 = vdwg.mxu0
    %353 = vmatprep.subr.mxu0 0.0
    %354 = vmatpush1.msra.mxu0 %v236
    %355 = vmatprep.subr.mxu0 0.0
    %356 = vmatpush1.msra.mxu0 %v239
    %357 = vmatprep.subr.mxu0 0.0
    %358 = vmatpush1.msra.mxu0 %v242
    %359 = vmatprep.subr.mxu0 0.0
    %360 = vmatpush1.msra.mxu0 %v245
    %361 = vmatprep.subr.mxu0 0.0
    %362 = vmatpush1.msra.mxu0 %v248
    %363 = vmatprep.subr.mxu0 0.0
    %364 = vmatpush1.msra.mxu0 %v251
    %365 = vmatprep.subr.mxu0 0.0
    %366 = vmatpush1.msra.mxu0 %v254
    %367 = vmatprep.subr.mxu0 0.0
    %368 = vmatpush1.msra.mxu0 %v257
    %369 = vmatprep.subr.mxu0 0.0
    %370 = vmatpush1.msra.mxu0 %v260
    %371 = vmatprep.subr.mxu0 0.0
    %372 = vmatpush1.msra.mxu0 %v263
    %373 = vmatprep.subr.mxu0 0.0
    %374 = vmatpush1.msra.mxu0 %v266
    %375 = vmatprep.subr.mxu0 0.0
    %376 = vmatpush1.msra.mxu0 %v269
    %377 = vmatprep.subr.mxu0 0.0
    %378 = vmatpush1.msra.mxu0 %v272
    %379 = vmatprep.subr.mxu0 0.0
    %380 = vmatpush1.msra.mxu0 %v275
    %381 = vmatprep.subr.mxu0 0.0
    %382 = vmatpush1.msra.mxu0 %v278
    %383 = vmatprep.subr.mxu0 0.0
    %384 = vmatpush1.msra.mxu0 %v281
    %385 = vmatprep.subr.mxu0 0.0
    %386 = vmatpush1.msra.mxu0 0.0
    %387 = vmatprep.subr.mxu0 0.0
    %388 = vmatpush1.msra.mxu0 0.0
    %389 = vmatprep.subr.mxu0 0.0
    %390 = vmatpush1.msra.mxu0 0.0
    %391 = vmatprep.subr.mxu0 0.0
    %392 = vmatpush1.msra.mxu0 0.0
    %393 = vmatprep.subr.mxu0 0.0
    %394 = vmatpush1.msra.mxu0 0.0
    %395 = vmatprep.subr.mxu0 0.0
    %396 = vmatpush1.msra.mxu0 0.0
    %397 = vmatprep.subr.mxu0 0.0
    %398 = vmatpush1.msra.mxu0 0.0
    %399 = vmatprep.subr.mxu0 0.0
    %400 = vmatpush1.msra.mxu0 0.0
    %401 = vmatprep.subr.mxu0 0.0
    %402 = vmatpush1.msra.mxu0 0.0
    %403 = vmatprep.subr.mxu0 0.0
    %404 = vmatpush1.msra.mxu0 0.0
    %405 = vmatprep.subr.mxu0 0.0
    %406 = vmatpush1.msra.mxu0 0.0
    %407 = vmatprep.subr.mxu0 0.0
    %408 = vmatpush1.msra.mxu0 0.0
    %409 = vmatprep.subr.mxu0 0.0
    %410 = vmatpush1.msra.mxu0 0.0
    %411 = vmatprep.subr.mxu0 0.0
    %412 = vmatpush1.msra.mxu0 0.0
    %413 = vmatprep.subr.mxu0 0.0
    %414 = vmatpush1.msra.mxu0 0.0
    %415 = vmatprep.subr.mxu0 0.0
    %416 = vmatpush1.msra.mxu0 0.0
    %417 = vmatprep.mubr.f32.mxu0 0.0
    %418 = vmatmul.mubr.f32.gmra.mrb[0].mxu0 %v216
    %v419 = vpop.f32.mrb[0].mxu0
    %v420 = vadd.f32 0.0, %v419
    %v421 = vpop.f32.mrb[0].mxu0
    %422 = vdwg.mxu0
    %v423 = vld [vmem:[#allocation10] sm:$0xff]
    %v424 = vld [vmem:[#allocation10 + $0x8] sm:$0xff]
    %v425 = vld [vmem:[#allocation10 + $0x10] sm:$0xff]
    %v426 = vld [vmem:[#allocation10 + $0x18] sm:$0xff]
    %v427 = vld [vmem:[#allocation10 + $0x20] sm:$0xff]
    %v428 = vld [vmem:[#allocation10 + $0x28] sm:$0xff]
    %v429 = vld [vmem:[#allocation10 + $0x30] sm:$0xff]
    %v430 = vld [vmem:[#allocation10 + $0x38] sm:$0xff]
    %v431 = vld [vmem:[#allocation10 + $0x40] sm:$0xff]
    %v432 = vld [vmem:[#allocation10 + $0x48] sm:$0xff]
    %v433 = vld [vmem:[#allocation10 + $0x50] sm:$0xff]
    %v434 = vld [vmem:[#allocation10 + $0x58] sm:$0xff]
    %v435 = vld [vmem:[#allocation10 + $0x60] sm:$0xff]
    %v436 = vld [vmem:[#allocation10 + $0x68] sm:$0xff]
    %v437 = vld [vmem:[#allocation10 + $0x70] sm:$0xff]
    %v438 = vld [vmem:[#allocation10 + $0x78] sm:$0xff]
    %v439 = vld [vmem:[#allocation10 + $0x80] sm:$0xff]
    %v440 = vld [vmem:[#allocation10 + $0x88] sm:$0xff]
    %v441 = vld [vmem:[#allocation10 + $0x90] sm:$0xff]
    %v442 = vld [vmem:[#allocation10 + $0x98] sm:$0xff]
    %v443 = vld [vmem:[#allocation10 + $0xa0] sm:$0xff]
    %v444 = vld [vmem:[#allocation10 + $0xa8] sm:$0xff]
    %v445 = vld [vmem:[#allocation10 + $0xb0] sm:$0xff]
    %v446 = vld [vmem:[#allocation10 + $0xb8] sm:$0xff]
    %v447 = vld [vmem:[#allocation10 + $0xc0] sm:$0xff]
    %v448 = vld [vmem:[#allocation10 + $0xc8] sm:$0xff]
    %v449 = vld [vmem:[#allocation10 + $0xd0] sm:$0xff]
    %v450 = vld [vmem:[#allocation10 + $0xd8] sm:$0xff]
    %v451 = vld [vmem:[#allocation10 + $0xe0] sm:$0xff]
    %v452 = vld [vmem:[#allocation10 + $0xe8] sm:$0xff]
    %v453 = vld [vmem:[#allocation10 + $0xf0] sm:$0xff]
    %v454 = vld [vmem:[#allocation10 + $0xf8] sm:$0xff]
    %v455 = vld [vmem:[#allocation10 + $0x100] sm:$0xff]
    %v456 = vld [vmem:[#allocation10 + $0x108] sm:$0xff]
    %v457 = vld [vmem:[#allocation10 + $0x110] sm:$0xff]
    %v458 = vld [vmem:[#allocation10 + $0x118] sm:$0xff]
    %v459 = vld [vmem:[#allocation10 + $0x120] sm:$0xff]
    %v460 = vld [vmem:[#allocation10 + $0x128] sm:$0xff]
    %v461 = vld [vmem:[#allocation10 + $0x130] sm:$0xff]
    %v462 = vld [vmem:[#allocation10 + $0x138] sm:$0xff]
    %v463 = vld [vmem:[#allocation10 + $0x140] sm:$0xff]
    %v464 = vld [vmem:[#allocation10 + $0x148] sm:$0xff]
    %v465 = vld [vmem:[#allocation10 + $0x150] sm:$0xff]
    %v466 = vld [vmem:[#allocation10 + $0x158] sm:$0xff]
    %v467 = vld [vmem:[#allocation10 + $0x160] sm:$0xff]
    %v468 = vld [vmem:[#allocation10 + $0x168] sm:$0xff]
    %v469 = vld [vmem:[#allocation10 + $0x170] sm:$0xff]
    %v470 = vld [vmem:[#allocation10 + $0x178] sm:$0xff]
    %v471 = vld [vmem:[#allocation10 + $0x180] sm:$0xff]
    %v472 = vld [vmem:[#allocation10 + $0x188] sm:$0xff]
    %v473 = vld [vmem:[#allocation10 + $0x190] sm:$0xff]
    %v474 = vld [vmem:[#allocation10 + $0x198] sm:$0xff]
    %v475 = vld [vmem:[#allocation10 + $0x1a0] sm:$0xff]
    %v476 = vld [vmem:[#allocation10 + $0x1a8] sm:$0xff]
    %v477 = vld [vmem:[#allocation10 + $0x1b0] sm:$0xff]
    %v478 = vld [vmem:[#allocation10 + $0x1b8] sm:$0xff]
    %v479 = vld [vmem:[#allocation10 + $0x1c0] sm:$0xff]
    %v480 = vld [vmem:[#allocation10 + $0x1c8] sm:$0xff]
    %v481 = vld [vmem:[#allocation10 + $0x1d0] sm:$0xff]
    %v482 = vld [vmem:[#allocation10 + $0x1d8] sm:$0xff]
    %v483 = vld [vmem:[#allocation10 + $0x1e0] sm:$0xff]
    %v484 = vld [vmem:[#allocation10 + $0x1e8] sm:$0xff]
    %v485 = vld [vmem:[#allocation10 + $0x1f0] sm:$0xff]
    %v486 = vld [vmem:[#allocation10 + $0x1f8] sm:$0xff]
    %v487 = vld [vmem:[#allocation10 + $0x200] sm:$0xff]
    %v488 = vld [vmem:[#allocation10 + $0x208] sm:$0xff]
    %v489 = vld [vmem:[#allocation10 + $0x210] sm:$0xff]
    %v490 = vld [vmem:[#allocation10 + $0x218] sm:$0xff]
    %v491 = vld [vmem:[#allocation10 + $0x220] sm:$0xff]
    %v492 = vld [vmem:[#allocation10 + $0x228] sm:$0xff]
    %v493 = vld [vmem:[#allocation10 + $0x230] sm:$0xff]
    %v494 = vld [vmem:[#allocation10 + $0x238] sm:$0xff]
    %v495 = vld [vmem:[#allocation10 + $0x240] sm:$0xff]
    %v496 = vld [vmem:[#allocation10 + $0x248] sm:$0xff]
    %v497 = vld [vmem:[#allocation10 + $0x250] sm:$0xff]
    %v498 = vld [vmem:[#allocation10 + $0x258] sm:$0xff]
    %v499 = vld [vmem:[#allocation10 + $0x260] sm:$0xff]
    %v500 = vld [vmem:[#allocation10 + $0x268] sm:$0xff]
    %v501 = vld [vmem:[#allocation10 + $0x270] sm:$0xff]
    %v502 = vld [vmem:[#allocation10 + $0x278] sm:$0xff]
    %503 = vmatprep.subr.mxu0 %v424
    %504 = vmatpush1.msra.mxu0 %v423
    %505 = vmatprep.subr.mxu0 %v429
    %506 = vmatpush1.msra.mxu0 %v428
    %507 = vmatprep.subr.mxu0 %v434
    %508 = vmatpush1.msra.mxu0 %v433
    %509 = vmatprep.subr.mxu0 %v439
    %510 = vmatpush1.msra.mxu0 %v438
    %511 = vmatprep.subr.mxu0 %v444
    %512 = vmatpush1.msra.mxu0 %v443
    %513 = vmatprep.subr.mxu0 %v449
    %514 = vmatpush1.msra.mxu0 %v448
    %515 = vmatprep.subr.mxu0 %v454
    %516 = vmatpush1.msra.mxu0 %v453
    %517 = vmatprep.subr.mxu0 %v459
    %518 = vmatpush1.msra.mxu0 %v458
    %519 = vmatprep.subr.mxu0 %v464
    %520 = vmatpush1.msra.mxu0 %v463
    %521 = vmatprep.subr.mxu0 %v469
    %522 = vmatpush1.msra.mxu0 %v468
    %523 = vmatprep.subr.mxu0 %v474
    %524 = vmatpush1.msra.mxu0 %v473
    %525 = vmatprep.subr.mxu0 %v479
    %526 = vmatpush1.msra.mxu0 %v478
    %527 = vmatprep.subr.mxu0 %v484
    %528 = vmatpush1.msra.mxu0 %v483
    %529 = vmatprep.subr.mxu0 %v489
    %530 = vmatpush1.msra.mxu0 %v488
    %531 = vmatprep.subr.mxu0 %v494
    %532 = vmatpush1.msra.mxu0 %v493
    %533 = vmatprep.subr.mxu0 %v499
    %534 = vmatpush1.msra.mxu0 %v498
    %535 = vmatprep.subr.mxu0 0.0
    %536 = vmatpush1.msra.mxu0 0.0
    %537 = vmatprep.subr.mxu0 0.0
    %538 = vmatpush1.msra.mxu0 0.0
    %539 = vmatprep.subr.mxu0 0.0
    %540 = vmatpush1.msra.mxu0 0.0
    %541 = vmatprep.subr.mxu0 0.0
    %542 = vmatpush1.msra.mxu0 0.0
    %543 = vmatprep.subr.mxu0 0.0
    %544 = vmatpush1.msra.mxu0 0.0
    %545 = vmatprep.subr.mxu0 0.0
    %546 = vmatpush1.msra.mxu0 0.0
    %547 = vmatprep.subr.mxu0 0.0
    %548 = vmatpush1.msra.mxu0 0.0
    %549 = vmatprep.subr.mxu0 0.0
    %550 = vmatpush1.msra.mxu0 0.0
    %551 = vmatprep.subr.mxu0 0.0
    %552 = vmatpush1.msra.mxu0 0.0
    %553 = vmatprep.subr.mxu0 0.0
    %554 = vmatpush1.msra.mxu0 0.0
    %555 = vmatprep.subr.mxu0 0.0
    %556 = vmatpush1.msra.mxu0 0.0
    %557 = vmatprep.subr.mxu0 0.0
    %558 = vmatpush1.msra.mxu0 0.0
    %559 = vmatprep.subr.mxu0 0.0
    %560 = vmatpush1.msra.mxu0 0.0
    %561 = vmatprep.subr.mxu0 0.0
    %562 = vmatpush1.msra.mxu0 0.0
    %563 = vmatprep.subr.mxu0 0.0
    %564 = vmatpush1.msra.mxu0 0.0
    %565 = vmatprep.subr.mxu0 0.0
    %566 = vmatpush1.msra.mxu0 0.0
    %567 = vmatprep.mubr.f32.mxu0 0.0
    %568 = vmatmul.mubr.f32.gmra.mrb[0].mxu0 %v233
    %v569 = vpop.f32.mrb[0].mxu0
    %v570 = vadd.f32 0.0, %v569
    %v571 = vpop.f32.mrb[0].mxu0
    %v572 = vadd.f32 0.0, %v571
    %573 = vdwg.mxu0
    %574 = vmatprep.subr.mxu0 %v426
    %575 = vmatpush1.msra.mxu0 %v425
    %576 = vmatprep.subr.mxu0 %v431
    %577 = vmatpush1.msra.mxu0 %v430
    %578 = vmatprep.subr.mxu0 %v436
    %579 = vmatpush1.msra.mxu0 %v435
    %580 = vmatprep.subr.mxu0 %v441
    %581 = vmatpush1.msra.mxu0 %v440
    %582 = vmatprep.subr.mxu0 %v446
    %583 = vmatpush1.msra.mxu0 %v445
    %584 = vmatprep.subr.mxu0 %v451
    %585 = vmatpush1.msra.mxu0 %v450
    %586 = vmatprep.subr.mxu0 %v456
    %587 = vmatpush1.msra.mxu0 %v455
    %588 = vmatprep.subr.mxu0 %v461
    %589 = vmatpush1.msra.mxu0 %v460
    %590 = vmatprep.subr.mxu0 %v466
    %591 = vmatpush1.msra.mxu0 %v465
    %592 = vmatprep.subr.mxu0 %v471
    %593 = vmatpush1.msra.mxu0 %v470
    %594 = vmatprep.subr.mxu0 %v476
    %595 = vmatpush1.msra.mxu0 %v475
    %596 = vmatprep.subr.mxu0 %v481
    %597 = vmatpush1.msra.mxu0 %v480
    %598 = vmatprep.subr.mxu0 %v486
    %599 = vmatpush1.msra.mxu0 %v485
    %600 = vmatprep.subr.mxu0 %v491
    %601 = vmatpush1.msra.mxu0 %v490
    %602 = vmatprep.subr.mxu0 %v496
    %603 = vmatpush1.msra.mxu0 %v495
    %604 = vmatprep.subr.mxu0 %v501
    %605 = vmatpush1.msra.mxu0 %v500
    %606 = vmatprep.subr.mxu0 0.0
    %607 = vmatpush1.msra.mxu0 0.0
    %608 = vmatprep.subr.mxu0 0.0
    %609 = vmatpush1.msra.mxu0 0.0
    %610 = vmatprep.subr.mxu0 0.0
    %611 = vmatpush1.msra.mxu0 0.0
    %612 = vmatprep.subr.mxu0 0.0
    %613 = vmatpush1.msra.mxu0 0.0
    %614 = vmatprep.subr.mxu0 0.0
    %615 = vmatpush1.msra.mxu0 0.0
    %616 = vmatprep.subr.mxu0 0.0
    %617 = vmatpush1.msra.mxu0 0.0
    %618 = vmatprep.subr.mxu0 0.0
    %619 = vmatpush1.msra.mxu0 0.0
    %620 = vmatprep.subr.mxu0 0.0
    %621 = vmatpush1.msra.mxu0 0.0
    %622 = vmatprep.subr.mxu0 0.0
    %623 = vmatpush1.msra.mxu0 0.0
    %624 = vmatprep.subr.mxu0 0.0
    %625 = vmatpush1.msra.mxu0 0.0
    %626 = vmatprep.subr.mxu0 0.0
    %627 = vmatpush1.msra.mxu0 0.0
    %628 = vmatprep.subr.mxu0 0.0
    %629 = vmatpush1.msra.mxu0 0.0
    %630 = vmatprep.subr.mxu0 0.0
    %631 = vmatpush1.msra.mxu0 0.0
    %632 = vmatprep.subr.mxu0 0.0
    %633 = vmatpush1.msra.mxu0 0.0
    %634 = vmatprep.subr.mxu0 0.0
    %635 = vmatpush1.msra.mxu0 0.0
    %636 = vmatprep.subr.mxu0 0.0
    %637 = vmatpush1.msra.mxu0 0.0
    %638 = vmatprep.mubr.f32.mxu0 0.0
    %639 = vmatmul.mubr.f32.gmra.mrb[0].mxu0 %v233
    %v640 = vpop.f32.mrb[0].mxu0
    %v641 = vadd.f32 0.0, %v640
    %v642 = vpop.f32.mrb[0].mxu0
    %v643 = vadd.f32 0.0, %v642
    %644 = vdwg.mxu0
    %645 = vmatprep.subr.mxu0 0.0
    %646 = vmatpush1.msra.mxu0 %v427
    %647 = vmatprep.subr.mxu0 0.0
    %648 = vmatpush1.msra.mxu0 %v432
    %649 = vmatprep.subr.mxu0 0.0
    %650 = vmatpush1.msra.mxu0 %v437
    %651 = vmatprep.subr.mxu0 0.0
    %652 = vmatpush1.msra.mxu0 %v442
    %653 = vmatprep.subr.mxu0 0.0
    %654 = vmatpush1.msra.mxu0 %v447
    %655 = vmatprep.subr.mxu0 0.0
    %656 = vmatpush1.msra.mxu0 %v452
    %657 = vmatprep.subr.mxu0 0.0
    %658 = vmatpush1.msra.mxu0 %v457
    %659 = vmatprep.subr.mxu0 0.0
    %660 = vmatpush1.msra.mxu0 %v462
    %661 = vmatprep.subr.mxu0 0.0
    %662 = vmatpush1.msra.mxu0 %v467
    %663 = vmatprep.subr.mxu0 0.0
    %664 = vmatpush1.msra.mxu0 %v472
    %665 = vmatprep.subr.mxu0 0.0
    %666 = vmatpush1.msra.mxu0 %v477
    %667 = vmatprep.subr.mxu0 0.0
    %668 = vmatpush1.msra.mxu0 %v482
    %669 = vmatprep.subr.mxu0 0.0
    %670 = vmatpush1.msra.mxu0 %v487
    %671 = vmatprep.subr.mxu0 0.0
    %672 = vmatpush1.msra.mxu0 %v492
    %673 = vmatprep.subr.mxu0 0.0
    %674 = vmatpush1.msra.mxu0 %v497
    %675 = vmatprep.subr.mxu0 0.0
    %676 = vmatpush1.msra.mxu0 %v502
    %677 = vmatprep.subr.mxu0 0.0
    %678 = vmatpush1.msra.mxu0 0.0
    %679 = vmatprep.subr.mxu0 0.0
    %680 = vmatpush1.msra.mxu0 0.0
    %681 = vmatprep.subr.mxu0 0.0
    %682 = vmatpush1.msra.mxu0 0.0
    %683 = vmatprep.subr.mxu0 0.0
    %684 = vmatpush1.msra.mxu0 0.0
    %685 = vmatprep.subr.mxu0 0.0
    %686 = vmatpush1.msra.mxu0 0.0
    %687 = vmatprep.subr.mxu0 0.0
    %688 = vmatpush1.msra.mxu0 0.0
    %689 = vmatprep.subr.mxu0 0.0
    %690 = vmatpush1.msra.mxu0 0.0
    %691 = vmatprep.subr.mxu0 0.0
    %692 = vmatpush1.msra.mxu0 0.0
    %693 = vmatprep.subr.mxu0 0.0
    %694 = vmatpush1.msra.mxu0 0.0
    %695 = vmatprep.subr.mxu0 0.0
    %696 = vmatpush1.msra.mxu0 0.0
    %697 = vmatprep.subr.mxu0 0.0
    %698 = vmatpush1.msra.mxu0 0.0
    %699 = vmatprep.subr.mxu0 0.0
    %700 = vmatpush1.msra.mxu0 0.0
    %701 = vmatprep.subr.mxu0 0.0
    %702 = vmatpush1.msra.mxu0 0.0
    %703 = vmatprep.subr.mxu0 0.0
    %704 = vmatpush1.msra.mxu0 0.0
    %705 = vmatprep.subr.mxu0 0.0
    %706 = vmatpush1.msra.mxu0 0.0
    %707 = vmatprep.subr.mxu0 0.0
    %708 = vmatpush1.msra.mxu0 0.0
    %709 = vmatprep.mubr.f32.mxu0 0.0
    %710 = vmatmul.mubr.f32.gmra.mrb[0].mxu0 %v233
    %v711 = vpop.f32.mrb[0].mxu0
    %v712 = vadd.f32 0.0, %v711
    %v713 = vpop.f32.mrb[0].mxu0
    %714 = vdwg.mxu0
    %v715 = vld [vmem:[#allocation11] sm:$0xff]
    %v716 = vld [vmem:[#allocation11 + $0x8] sm:$0xff]
    %v717 = vld [vmem:[#allocation11 + $0x10] sm:$0xff]
    %v718 = vld [vmem:[#allocation11 + $0x18] sm:$0xff]
    %v719 = vld [vmem:[#allocation11 + $0x20] sm:$0xff]
    %v720 = vld [vmem:[#allocation11 + $0x28] sm:$0xff]
    %v721 = vld [vmem:[#allocation11 + $0x30] sm:$0xff]
    %v722 = vld [vmem:[#allocation11 + $0x38] sm:$0xff]
    %v723 = vld [vmem:[#allocation11 + $0x40] sm:$0xff]
    %v724 = vld [vmem:[#allocation11 + $0x48] sm:$0xff]
    %v725 = vld [vmem:[#allocation11 + $0x50] sm:$0xff]
    %v726 = vld [vmem:[#allocation11 + $0x58] sm:$0xff]
    %v727 = vld [vmem:[#allocation11 + $0x60] sm:$0xff]
    %v728 = vld [vmem:[#allocation11 + $0x68] sm:$0xff]
    %v729 = vld [vmem:[#allocation11 + $0x70] sm:$0xff]
    %v730 = vld [vmem:[#allocation11 + $0x78] sm:$0xff]
    %v731 = vld [vmem:[#allocation11 + $0x80] sm:$0xff]
    %v732 = vld [vmem:[#allocation11 + $0x88] sm:$0xff]
    %v733 = vld [vmem:[#allocation11 + $0x90] sm:$0xff]
    %v734 = vld [vmem:[#allocation11 + $0x98] sm:$0xff]
    %v735 = vld [vmem:[#allocation11 + $0xa0] sm:$0xff]
    %v736 = vld [vmem:[#allocation11 + $0xa8] sm:$0xff]
    %v737 = vld [vmem:[#allocation11 + $0xb0] sm:$0xff]
    %v738 = vld [vmem:[#allocation11 + $0xb8] sm:$0xff]
    %v739 = vld [vmem:[#allocation11 + $0xc0] sm:$0xff]
    %v740 = vld [vmem:[#allocation11 + $0xc8] sm:$0xff]
    %v741 = vld [vmem:[#allocation11 + $0xd0] sm:$0xff]
    %v742 = vld [vmem:[#allocation11 + $0xd8] sm:$0xff]
    %v743 = vld [vmem:[#allocation11 + $0xe0] sm:$0xff]
    %v744 = vld [vmem:[#allocation11 + $0xe8] sm:$0xff]
    %v745 = vld [vmem:[#allocation11 + $0xf0] sm:$0xff]
    %v746 = vld [vmem:[#allocation11 + $0xf8] sm:$0xff]
    %747 = vmatprep.subr.mxu0 %v716
    %748 = vmatpush1.msra.mxu0 %v715
    %749 = vmatprep.subr.mxu0 %v718
    %750 = vmatpush1.msra.mxu0 %v717
    %751 = vmatprep.subr.mxu0 %v720
    %752 = vmatpush1.msra.mxu0 %v719
    %753 = vmatprep.subr.mxu0 %v722
    %754 = vmatpush1.msra.mxu0 %v721
    %755 = vmatprep.subr.mxu0 %v724
    %756 = vmatpush1.msra.mxu0 %v723
    %757 = vmatprep.subr.mxu0 %v726
    %758 = vmatpush1.msra.mxu0 %v725
    %759 = vmatprep.subr.mxu0 %v728
    %760 = vmatpush1.msra.mxu0 %v727
    %761 = vmatprep.subr.mxu0 %v730
    %762 = vmatpush1.msra.mxu0 %v729
    %763 = vmatprep.subr.mxu0 %v732
    %764 = vmatpush1.msra.mxu0 %v731
    %765 = vmatprep.subr.mxu0 %v734
    %766 = vmatpush1.msra.mxu0 %v733
    %767 = vmatprep.subr.mxu0 %v736
    %768 = vmatpush1.msra.mxu0 %v735
    %769 = vmatprep.subr.mxu0 %v738
    %770 = vmatpush1.msra.mxu0 %v737
    %771 = vmatprep.subr.mxu0 %v740
    %772 = vmatpush1.msra.mxu0 %v739
    %773 = vmatprep.subr.mxu0 %v742
    %774 = vmatpush1.msra.mxu0 %v741
    %775 = vmatprep.subr.mxu0 %v744
    %776 = vmatpush1.msra.mxu0 %v743
    %777 = vmatprep.subr.mxu0 %v746
    %778 = vmatpush1.msra.mxu0 %v745
    %779 = vmatprep.subr.mxu0 0.0
    %780 = vmatpush1.msra.mxu0 0.0
    %781 = vmatprep.subr.mxu0 0.0
    %782 = vmatpush1.msra.mxu0 0.0
    %783 = vmatprep.subr.mxu0 0.0
    %784 = vmatpush1.msra.mxu0 0.0
    %785 = vmatprep.subr.mxu0 0.0
    %786 = vmatpush1.msra.mxu0 0.0
    %787 = vmatprep.subr.mxu0 0.0
    %788 = vmatpush1.msra.mxu0 0.0
    %789 = vmatprep.subr.mxu0 0.0
    %790 = vmatpush1.msra.mxu0 0.0
    %791 = vmatprep.subr.mxu0 0.0
    %792 = vmatpush1.msra.mxu0 0.0
    %793 = vmatprep.subr.mxu0 0.0
    %794 = vmatpush1.msra.mxu0 0.0
    %795 = vmatprep.subr.mxu0 0.0
    %796 = vmatpush1.msra.mxu0 0.0
    %797 = vmatprep.subr.mxu0 0.0
    %798 = vmatpush1.msra.mxu0 0.0
    %799 = vmatprep.subr.mxu0 0.0
    %800 = vmatpush1.msra.mxu0 0.0
    %801 = vmatprep.subr.mxu0 0.0
    %802 = vmatpush1.msra.mxu0 0.0
    %803 = vmatprep.subr.mxu0 0.0
    %804 = vmatpush1.msra.mxu0 0.0
    %805 = vmatprep.subr.mxu0 0.0
    %806 = vmatpush1.msra.mxu0 0.0
    %807 = vmatprep.subr.mxu0 0.0
    %808 = vmatpush1.msra.mxu0 0.0
    %809 = vmatprep.subr.mxu0 0.0
    %810 = vmatpush1.msra.mxu0 0.0
    %811 = vmatprep.mubr.f32.mxu0 0.0
    %812 = vmatmul.mubr.f32.gmra.mrb[0].mxu0 %v217
    %v813 = vpop.f32.mrb[0].mxu0
    %v814 = vadd.f32 0.0, %v813
    %v815 = vpop.f32.mrb[0].mxu0
    %v816 = vadd.f32 0.0, %v815
    %817 = vmatprep.mubr.f32.mxu0 0.0
    %818 = vmatmul.mubr.f32.gmra.mrb[0].mxu0 %v218
    %v819 = vpop.f32.mrb[0].mxu0
    %v820 = vadd.f32 0.0, %v819
    %v821 = vpop.f32.mrb[0].mxu0
    %v822 = vadd.f32 0.0, %v821
    %823 = vmatprep.mubr.f32.mxu0 0.0
    %824 = vmatmul.mubr.f32.gmra.mrb[0].mxu0 %v219
    %v825 = vpop.f32.mrb[0].mxu0
    %v826 = vadd.f32 0.0, %v825
    %v827 = vpop.f32.mrb[0].mxu0
    %v828 = vadd.f32 0.0, %v827
    %829 = vmatprep.mubr.f32.mxu0 0.0
    %830 = vmatmul.mubr.f32.gmra.mrb[0].mxu0 %v220
    %v831 = vpop.f32.mrb[0].mxu0
    %v832 = vadd.f32 0.0, %v831
    %v833 = vpop.f32.mrb[0].mxu0
    %v834 = vadd.f32 0.0, %v833
    %835 = vmatprep.mubr.f32.mxu0 0.0
    %836 = vmatmul.mubr.f32.gmra.mrb[0].mxu0 %v221
    %v837 = vpop.f32.mrb[0].mxu0
    %v838 = vadd.f32 0.0, %v837
    %v839 = vpop.f32.mrb[0].mxu0
    %v840 = vadd.f32 0.0, %v839
    %841 = vmatprep.mubr.f32.mxu0 0.0
    %842 = vmatmul.mubr.f32.gmra.mrb[0].mxu0 %v222
    %v843 = vpop.f32.mrb[0].mxu0
    %v844 = vadd.f32 0.0, %v843
    %v845 = vpop.f32.mrb[0].mxu0
    %v846 = vadd.f32 0.0, %v845
    %847 = vmatprep.mubr.f32.mxu0 0.0
    %848 = vmatmul.mubr.f32.gmra.mrb[0].mxu0 %v223
    %v849 = vpop.f32.mrb[0].mxu0
    %v850 = vadd.f32 0.0, %v849
    %v851 = vpop.f32.mrb[0].mxu0
    %v852 = vadd.f32 0.0, %v851
    %853 = vmatprep.mubr.f32.mxu0 0.0
    %854 = vmatmul.mubr.f32.gmra.mrb[0].mxu0 %v224
    %v855 = vpop.f32.mrb[0].mxu0
    %v856 = vadd.f32 0.0, %v855
    %v857 = vpop.f32.mrb[0].mxu0
    %v858 = vadd.f32 0.0, %v857
    %859 = vmatprep.mubr.f32.mxu0 0.0
    %860 = vmatmul.mubr.f32.gmra.mrb[0].mxu0 %v225
    %v861 = vpop.f32.mrb[0].mxu0
    %v862 = vadd.f32 0.0, %v861
    %v863 = vpop.f32.mrb[0].mxu0
    %v864 = vadd.f32 0.0, %v863
    %865 = vmatprep.mubr.f32.mxu0 0.0
    %866 = vmatmul.mubr.f32.gmra.mrb[0].mxu0 %v226
    %v867 = vpop.f32.mrb[0].mxu0
    %v868 = vadd.f32 0.0, %v867
    %v869 = vpop.f32.mrb[0].mxu0
    %v870 = vadd.f32 0.0, %v869
    %871 = vmatprep.mubr.f32.mxu0 0.0
    %872 = vmatmul.mubr.f32.gmra.mrb[0].mxu0 %v227
    %v873 = vpop.f32.mrb[0].mxu0
    %v874 = vadd.f32 0.0, %v873
    %v875 = vpop.f32.mrb[0].mxu0
    %v876 = vadd.f32 0.0, %v875
    %877 = vmatprep.mubr.f32.mxu0 0.0
    %878 = vmatmul.mubr.f32.gmra.mrb[0].mxu0 %v228
    %v879 = vpop.f32.mrb[0].mxu0
    %v880 = vadd.f32 0.0, %v879
    %v881 = vpop.f32.mrb[0].mxu0
    %v882 = vadd.f32 0.0, %v881
    %883 = vmatprep.mubr.f32.mxu0 0.0
    %884 = vmatmul.mubr.f32.gmra.mrb[0].mxu0 %v229
    %v885 = vpop.f32.mrb[0].mxu0
    %v886 = vadd.f32 0.0, %v885
    %v887 = vpop.f32.mrb[0].mxu0
    %v888 = vadd.f32 0.0, %v887
    %889 = vmatprep.mubr.f32.mxu0 0.0
    %890 = vmatmul.mubr.f32.gmra.mrb[0].mxu0 %v230
    %v891 = vpop.f32.mrb[0].mxu0
    %v892 = vadd.f32 0.0, %v891
    %v893 = vpop.f32.mrb[0].mxu0
    %v894 = vadd.f32 0.0, %v893
    %895 = vmatprep.mubr.f32.mxu0 0.0
    %896 = vmatmul.mubr.f32.gmra.mrb[0].mxu0 %v231
    %v897 = vpop.f32.mrb[0].mxu0
    %v898 = vadd.f32 0.0, %v897
    %v899 = vpop.f32.mrb[0].mxu0
    %v900 = vadd.f32 0.0, %v899
    %901 = vmatprep.mubr.f32.mxu0 0.0
    %902 = vmatmul.mubr.f32.gmra.mrb[0].mxu0 %v232
    %v903 = vpop.f32.mrb[0].mxu0
    %v904 = vadd.f32 0.0, %v903
    %v905 = vpop.f32.mrb[0].mxu0
    %v906 = vadd.f32 0.0, %v905
    %907 = vdwg.mxu0
    %v908 = vadd.f32 %v349, %v570
    %v909 = vadd.f32 %v351, %v572
    %910 = vxpose.xlu0.b32.start [1/16] %v214, 128
    %911 = vxpose.xlu0.b32.cont [2/16] %v215, 128
    %912 = vxpose.xlu0.b32.cont [3/16] 0.0, 128
    %913 = vxpose.xlu0.b32.cont [4/16] 0.0, 128
    %914 = vxpose.xlu0.b32.cont [5/16] 0.0, 128
    %915 = vxpose.xlu0.b32.cont [6/16] 0.0, 128
    %916 = vxpose.xlu0.b32.cont [7/16] 0.0, 128
    %917 = vxpose.xlu0.b32.cont [8/16] 0.0, 128
    %918 = vxpose.xlu0.b32.cont [9/16] 0.0, 128
    %919 = vxpose.xlu0.b32.cont [10/16] 0.0, 128
    %920 = vxpose.xlu0.b32.cont [11/16] 0.0, 128
    %921 = vxpose.xlu0.b32.cont [12/16] 0.0, 128
    %922 = vxpose.xlu0.b32.cont [13/16] 0.0, 128
    %923 = vxpose.xlu0.b32.cont [14/16] 0.0, 128
    %924 = vxpose.xlu0.b32.cont [15/16] 0.0, 128
    %925 = vxpose.xlu0.b32.end [16/16] 0.0, 128
    %v926 = vpop.trf.xlu0
    %v927 = vpop.trf.xlu0
    %v928 = vpop.trf.xlu0
    %v929 = vpop.trf.xlu0
    %v930 = vpop.trf.xlu0
    %v931 = vpop.trf.xlu0
    %v932 = vpop.trf.xlu0
    %v933 = vpop.trf.xlu0
    %v934 = vpop.trf.xlu0
    %v935 = vpop.trf.xlu0
    %v936 = vpop.trf.xlu0
    %v937 = vpop.trf.xlu0
    %v938 = vpop.trf.xlu0
    %v939 = vpop.trf.xlu0
    %v940 = vpop.trf.xlu0
    %v941 = vpop.trf.xlu0
    %vm942 = vcmask 130048
    %v944 = vsel %vm942, %v926, 0
    %v947 = vsel %vm942, %v927, 0
    %v950 = vsel %vm942, %v928, 0
    %v953 = vsel %vm942, %v929, 0
    %v956 = vsel %vm942, %v930, 0
    %v959 = vsel %vm942, %v931, 0
    %v962 = vsel %vm942, %v932, 0
    %v965 = vsel %vm942, %v933, 0
    %v968 = vsel %vm942, %v934, 0
    %v971 = vsel %vm942, %v935, 0
    %v974 = vsel %vm942, %v936, 0
    %v977 = vsel %vm942, %v937, 0
    %v980 = vsel %vm942, %v938, 0
    %v983 = vsel %vm942, %v939, 0
    %v986 = vsel %vm942, %v940, 0
    %v989 = vsel %vm942, %v941, 0
    %991 = vmatprep.subr.mxu0 0.0
    %992 = vmatpush1.msra.mxu0 %v908
    %993 = vmatprep.subr.mxu0 0.0
    %994 = vmatpush1.msra.mxu0 %v909
    %995 = vmatprep.subr.mxu0 0.0
    %996 = vmatpush1.msra.mxu0 0.0
    %997 = vmatprep.subr.mxu0 0.0
    %998 = vmatpush1.msra.mxu0 0.0
    %999 = vmatprep.subr.mxu0 0.0
    %1000 = vmatpush1.msra.mxu0 0.0
    %1001 = vmatprep.subr.mxu0 0.0
    %1002 = vmatpush1.msra.mxu0 0.0
    %1003 = vmatprep.subr.mxu0 0.0
    %1004 = vmatpush1.msra.mxu0 0.0
    %1005 = vmatprep.subr.mxu0 0.0
    %1006 = vmatpush1.msra.mxu0 0.0
    %1007 = vmatprep.subr.mxu0 0.0
    %1008 = vmatpush1.msra.mxu0 0.0
    %1009 = vmatprep.subr.mxu0 0.0
    %1010 = vmatpush1.msra.mxu0 0.0
    %1011 = vmatprep.subr.mxu0 0.0
    %1012 = vmatpush1.msra.mxu0 0.0
    %1013 = vmatprep.subr.mxu0 0.0
    %1014 = vmatpush1.msra.mxu0 0.0
    %1015 = vmatprep.subr.mxu0 0.0
    %1016 = vmatpush1.msra.mxu0 0.0
    %1017 = vmatprep.subr.mxu0 0.0
    %1018 = vmatpush1.msra.mxu0 0.0
    %1019 = vmatprep.subr.mxu0 0.0
    %1020 = vmatpush1.msra.mxu0 0.0
    %1021 = vmatprep.subr.mxu0 0.0
    %1022 = vmatpush1.msra.mxu0 0.0
    %1023 = vmatprep.subr.mxu0 0.0
    %1024 = vmatpush1.msra.mxu0 0.0
    %1025 = vmatprep.subr.mxu0 0.0
    %1026 = vmatpush1.msra.mxu0 0.0
    %1027 = vmatprep.subr.mxu0 0.0
    %1028 = vmatpush1.msra.mxu0 0.0
    %1029 = vmatprep.subr.mxu0 0.0
    %1030 = vmatpush1.msra.mxu0 0.0
    %1031 = vmatprep.subr.mxu0 0.0
    %1032 = vmatpush1.msra.mxu0 0.0
    %1033 = vmatprep.subr.mxu0 0.0
    %1034 = vmatpush1.msra.mxu0 0.0
    %1035 = vmatprep.subr.mxu0 0.0
    %1036 = vmatpush1.msra.mxu0 0.0
    %1037 = vmatprep.subr.mxu0 0.0
    %1038 = vmatpush1.msra.mxu0 0.0
    %1039 = vmatprep.subr.mxu0 0.0
    %1040 = vmatpush1.msra.mxu0 0.0
    %1041 = vmatprep.subr.mxu0 0.0
    %1042 = vmatpush1.msra.mxu0 0.0
    %1043 = vmatprep.subr.mxu0 0.0
    %1044 = vmatpush1.msra.mxu0 0.0
    %1045 = vmatprep.subr.mxu0 0.0
    %1046 = vmatpush1.msra.mxu0 0.0
    %1047 = vmatprep.subr.mxu0 0.0
    %1048 = vmatpush1.msra.mxu0 0.0
    %1049 = vmatprep.subr.mxu0 0.0
    %1050 = vmatpush1.msra.mxu0 0.0
    %1051 = vmatprep.subr.mxu0 0.0
    %1052 = vmatpush1.msra.mxu0 0.0
    %1053 = vmatprep.subr.mxu0 0.0
    %1054 = vmatpush1.msra.mxu0 0.0
    %1055 = vmatprep.mubr.f32.mxu0 0.0
    %1056 = vmatmul.mubr.f32.gmra.mrb[0].mxu0 %v944
    %v1057 = vpop.f32.mrb[0].mxu0
    %v1058 = vadd.f32 %v814, %v1057
    %v1059 = vpop.f32.mrb[0].mxu0
    %1060 = vmatprep.mubr.f32.mxu0 0.0
    %1061 = vmatmul.mubr.f32.gmra.mrb[0].mxu0 %v947
    %v1062 = vpop.f32.mrb[0].mxu0
    %v1063 = vadd.f32 %v820, %v1062
    %v1064 = vpop.f32.mrb[0].mxu0
    %1065 = vmatprep.mubr.f32.mxu0 0.0
    %1066 = vmatmul.mubr.f32.gmra.mrb[0].mxu0 %v950
    %v1067 = vpop.f32.mrb[0].mxu0
    %v1068 = vadd.f32 %v826, %v1067
    %v1069 = vpop.f32.mrb[0].mxu0
    %1070 = vmatprep.mubr.f32.mxu0 0.0
    %1071 = vmatmul.mubr.f32.gmra.mrb[0].mxu0 %v953
    %v1072 = vpop.f32.mrb[0].mxu0
    %v1073 = vadd.f32 %v832, %v1072
    %v1074 = vpop.f32.mrb[0].mxu0
    %1075 = vmatprep.mubr.f32.mxu0 0.0
    %1076 = vmatmul.mubr.f32.gmra.mrb[0].mxu0 %v956
    %v1077 = vpop.f32.mrb[0].mxu0
    %v1078 = vadd.f32 %v838, %v1077
    %v1079 = vpop.f32.mrb[0].mxu0
    %1080 = vmatprep.mubr.f32.mxu0 0.0
    %1081 = vmatmul.mubr.f32.gmra.mrb[0].mxu0 %v959
    %v1082 = vpop.f32.mrb[0].mxu0
    %v1083 = vadd.f32 %v844, %v1082
    %v1084 = vpop.f32.mrb[0].mxu0
    %1085 = vmatprep.mubr.f32.mxu0 0.0
    %1086 = vmatmul.mubr.f32.gmra.mrb[0].mxu0 %v962
    %v1087 = vpop.f32.mrb[0].mxu0
    %v1088 = vadd.f32 %v850, %v1087
    %v1089 = vpop.f32.mrb[0].mxu0
    %1090 = vmatprep.mubr.f32.mxu0 0.0
    %1091 = vmatmul.mubr.f32.gmra.mrb[0].mxu0 %v965
    %v1092 = vpop.f32.mrb[0].mxu0
    %v1093 = vadd.f32 %v856, %v1092
    %v1094 = vpop.f32.mrb[0].mxu0
    %1095 = vmatprep.mubr.f32.mxu0 0.0
    %1096 = vmatmul.mubr.f32.gmra.mrb[0].mxu0 %v968
    %v1097 = vpop.f32.mrb[0].mxu0
    %v1098 = vadd.f32 %v862, %v1097
    %v1099 = vpop.f32.mrb[0].mxu0
    %1100 = vmatprep.mubr.f32.mxu0 0.0
    %1101 = vmatmul.mubr.f32.gmra.mrb[0].mxu0 %v971
    %v1102 = vpop.f32.mrb[0].mxu0
    %v1103 = vadd.f32 %v868, %v1102
    %v1104 = vpop.f32.mrb[0].mxu0
    %1105 = vmatprep.mubr.f32.mxu0 0.0
    %1106 = vmatmul.mubr.f32.gmra.mrb[0].mxu0 %v974
    %v1107 = vpop.f32.mrb[0].mxu0
    %v1108 = vadd.f32 %v874, %v1107
    %v1109 = vpop.f32.mrb[0].mxu0
    %1110 = vmatprep.mubr.f32.mxu0 0.0
    %1111 = vmatmul.mubr.f32.gmra.mrb[0].mxu0 %v977
    %v1112 = vpop.f32.mrb[0].mxu0
    %v1113 = vadd.f32 %v880, %v1112
    %v1114 = vpop.f32.mrb[0].mxu0
    %1115 = vmatprep.mubr.f32.mxu0 0.0
    %1116 = vmatmul.mubr.f32.gmra.mrb[0].mxu0 %v980
    %v1117 = vpop.f32.mrb[0].mxu0
    %v1118 = vadd.f32 %v886, %v1117
    %v1119 = vpop.f32.mrb[0].mxu0
    %1120 = vmatprep.mubr.f32.mxu0 0.0
    %1121 = vmatmul.mubr.f32.gmra.mrb[0].mxu0 %v983
    %v1122 = vpop.f32.mrb[0].mxu0
    %v1123 = vadd.f32 %v892, %v1122
    %v1124 = vpop.f32.mrb[0].mxu0
    %1125 = vmatprep.mubr.f32.mxu0 0.0
    %1126 = vmatmul.mubr.f32.gmra.mrb[0].mxu0 %v986
    %v1127 = vpop.f32.mrb[0].mxu0
    %v1128 = vadd.f32 %v898, %v1127
    %v1129 = vpop.f32.mrb[0].mxu0
    %1130 = vmatprep.mubr.f32.mxu0 0.0
    %1131 = vmatmul.mubr.f32.gmra.mrb[0].mxu0 %v989
    %v1132 = vpop.f32.mrb[0].mxu0
    %v1133 = vadd.f32 %v904, %v1132
    %v1134 = vpop.f32.mrb[0].mxu0
    %1135 = vdwg.mxu0
    %v1136 = vld [vmem:[%s12] sm:$0x1]
    %v1138 = vlaneseq
    %v1139 = vshrl.u32 %v1138, 7
    %v1140 = vsub.s32 0, %v1139
    %v1141 = vrot.slane %v1136, %v1140
    %v1143 = vadd.f32 %v1058, %v1141
    %v1144 = vadd.f32 %v1063, %v1141
    %v1145 = vadd.f32 %v1068, %v1141
    %v1146 = vadd.f32 %v1073, %v1141
    %v1147 = vadd.f32 %v1078, %v1141
    %v1148 = vadd.f32 %v1083, %v1141
    %v1149 = vadd.f32 %v1088, %v1141
    %v1150 = vadd.f32 %v1093, %v1141
    %v1151 = vadd.f32 %v1098, %v1141
    %v1152 = vadd.f32 %v1103, %v1141
    %v1153 = vadd.f32 %v1108, %v1141
    %v1154 = vadd.f32 %v1113, %v1141
    %v1155 = vadd.f32 %v1118, %v1141
    %v1156 = vadd.f32 %v1123, %v1141
    %v1157 = vadd.f32 %v1128, %v1141
    %v1158 = vadd.f32 %v1133, %v1141
    %1159 = vmatprep.subr.mxu0 0.0
    %1160 = vmatpush1.msra.mxu0 %v1143
    %1161 = vmatprep.subr.mxu0 0.0
    %1162 = vmatpush1.msra.mxu0 %v1144
    %1163 = vmatprep.subr.mxu0 0.0
    %1164 = vmatpush1.msra.mxu0 %v1145
    %1165 = vmatprep.subr.mxu0 0.0
    %1166 = vmatpush1.msra.mxu0 %v1146
    %1167 = vmatprep.subr.mxu0 0.0
    %1168 = vmatpush1.msra.mxu0 %v1147
    %1169 = vmatprep.subr.mxu0 0.0
    %1170 = vmatpush1.msra.mxu0 %v1148
    %1171 = vmatprep.subr.mxu0 0.0
    %1172 = vmatpush1.msra.mxu0 %v1149
    %1173 = vmatprep.subr.mxu0 0.0
    %1174 = vmatpush1.msra.mxu0 %v1150
    %1175 = vmatprep.subr.mxu0 0.0
    %1176 = vmatpush1.msra.mxu0 %v1151
    %1177 = vmatprep.subr.mxu0 0.0
    %1178 = vmatpush1.msra.mxu0 %v1152
    %1179 = vmatprep.subr.mxu0 0.0
    %1180 = vmatpush1.msra.mxu0 %v1153
    %1181 = vmatprep.subr.mxu0 0.0
    %1182 = vmatpush1.msra.mxu0 %v1154
    %1183 = vmatprep.subr.mxu0 0.0
    %1184 = vmatpush1.msra.mxu0 %v1155
    %1185 = vmatprep.subr.mxu0 0.0
    %1186 = vmatpush1.msra.mxu0 %v1156
    %1187 = vmatprep.subr.mxu0 0.0
    %1188 = vmatpush1.msra.mxu0 %v1157
    %1189 = vmatprep.subr.mxu0 0.0
    %1190 = vmatpush1.msra.mxu0 %v1158
    %1191 = vmatprep.subr.mxu0 0.0
    %1192 = vmatpush1.msra.mxu0 0.0
    %1193 = vmatprep.subr.mxu0 0.0
    %1194 = vmatpush1.msra.mxu0 0.0
    %1195 = vmatprep.subr.mxu0 0.0
    %1196 = vmatpush1.msra.mxu0 0.0
    %1197 = vmatprep.subr.mxu0 0.0
    %1198 = vmatpush1.msra.mxu0 0.0
    %1199 = vmatprep.subr.mxu0 0.0
    %1200 = vmatpush1.msra.mxu0 0.0
    %1201 = vmatprep.subr.mxu0 0.0
    %1202 = vmatpush1.msra.mxu0 0.0
    %1203 = vmatprep.subr.mxu0 0.0
    %1204 = vmatpush1.msra.mxu0 0.0
    %1205 = vmatprep.subr.mxu0 0.0
    %1206 = vmatpush1.msra.mxu0 0.0
    %1207 = vmatprep.subr.mxu0 0.0
    %1208 = vmatpush1.msra.mxu0 0.0
    %1209 = vmatprep.subr.mxu0 0.0
    %1210 = vmatpush1.msra.mxu0 0.0
    %1211 = vmatprep.subr.mxu0 0.0
    %1212 = vmatpush1.msra.mxu0 0.0
    %1213 = vmatprep.subr.mxu0 0.0
    %1214 = vmatpush1.msra.mxu0 0.0
    %1215 = vmatprep.subr.mxu0 0.0
    %1216 = vmatpush1.msra.mxu0 0.0
    %1217 = vmatprep.subr.mxu0 0.0
    %1218 = vmatpush1.msra.mxu0 0.0
    %1219 = vmatprep.subr.mxu0 0.0
    %1220 = vmatpush1.msra.mxu0 0.0
    %1221 = vmatprep.subr.mxu0 0.0
    %1222 = vmatpush1.msra.mxu0 0.0
    %1223 = vmatprep.mubr.f32.mxu0 0.0
    %1224 = vmatmul.mubr.f32.gmra.mrb[0].mxu0 %v215
    %v1225 = vpop.f32.mrb[0].mxu0
    %v1226 = vadd.f32 0.0, %v1225
    %v1227 = vpop.f32.mrb[0].mxu0
    %1228 = vdwg.mxu0
    %v1229 = vld [vmem:[#allocation13] sm:$0xff]
    %v1230 = vld [vmem:[#allocation13 + $0x8] sm:$0xff]
    %v1231 = vld [vmem:[#allocation13 + $0x10] sm:$0xff]
    %v1232 = vld [vmem:[#allocation13 + $0x18] sm:$0xff]
    %v1233 = vld [vmem:[#allocation13 + $0x20] sm:$0xff]
    %v1234 = vld [vmem:[#allocation13 + $0x28] sm:$0xff]
    %v1235 = vld [vmem:[#allocation13 + $0x30] sm:$0xff]
    %v1236 = vld [vmem:[#allocation13 + $0x38] sm:$0xff]
    %v1237 = vld [vmem:[#allocation13 + $0x40] sm:$0xff]
    %v1238 = vld [vmem:[#allocation13 + $0x48] sm:$0xff]
    %v1239 = vld [vmem:[#allocation13 + $0x50] sm:$0xff]
    %v1240 = vld [vmem:[#allocation13 + $0x58] sm:$0xff]
    %v1241 = vld [vmem:[#allocation13 + $0x60] sm:$0xff]
    %v1242 = vld [vmem:[#allocation13 + $0x68] sm:$0xff]
    %v1243 = vld [vmem:[#allocation13 + $0x70] sm:$0xff]
    %v1244 = vld [vmem:[#allocation13 + $0x78] sm:$0xff]
    %1245 = vmatprep.subr.mxu0 0.0
    %1246 = vmatpush1.msra.mxu0 %v1229
    %1247 = vmatprep.subr.mxu0 0.0
    %1248 = vmatpush1.msra.mxu0 %v1230
    %1249 = vmatprep.subr.mxu0 0.0
    %1250 = vmatpush1.msra.mxu0 %v1231
    %1251 = vmatprep.subr.mxu0 0.0
    %1252 = vmatpush1.msra.mxu0 %v1232
    %1253 = vmatprep.subr.mxu0 0.0
    %1254 = vmatpush1.msra.mxu0 %v1233
    %1255 = vmatprep.subr.mxu0 0.0
    %1256 = vmatpush1.msra.mxu0 %v1234
    %1257 = vmatprep.subr.mxu0 0.0
    %1258 = vmatpush1.msra.mxu0 %v1235
    %1259 = vmatprep.subr.mxu0 0.0
    %1260 = vmatpush1.msra.mxu0 %v1236
    %1261 = vmatprep.subr.mxu0 0.0
    %1262 = vmatpush1.msra.mxu0 %v1237
    %1263 = vmatprep.subr.mxu0 0.0
    %1264 = vmatpush1.msra.mxu0 %v1238
    %1265 = vmatprep.subr.mxu0 0.0
    %1266 = vmatpush1.msra.mxu0 %v1239
    %1267 = vmatprep.subr.mxu0 0.0
    %1268 = vmatpush1.msra.mxu0 %v1240
    %1269 = vmatprep.subr.mxu0 0.0
    %1270 = vmatpush1.msra.mxu0 %v1241
    %1271 = vmatprep.subr.mxu0 0.0
    %1272 = vmatpush1.msra.mxu0 %v1242
    %1273 = vmatprep.subr.mxu0 0.0
    %1274 = vmatpush1.msra.mxu0 %v1243
    %1275 = vmatprep.subr.mxu0 0.0
    %1276 = vmatpush1.msra.mxu0 %v1244
    %1277 = vmatprep.subr.mxu0 0.0
    %1278 = vmatpush1.msra.mxu0 0.0
    %1279 = vmatprep.subr.mxu0 0.0
    %1280 = vmatpush1.msra.mxu0 0.0
    %1281 = vmatprep.subr.mxu0 0.0
    %1282 = vmatpush1.msra.mxu0 0.0
    %1283 = vmatprep.subr.mxu0 0.0
    %1284 = vmatpush1.msra.mxu0 0.0
    %1285 = vmatprep.subr.mxu0 0.0
    %1286 = vmatpush1.msra.mxu0 0.0
    %1287 = vmatprep.subr.mxu0 0.0
    %1288 = vmatpush1.msra.mxu0 0.0
    %1289 = vmatprep.subr.mxu0 0.0
    %1290 = vmatpush1.msra.mxu0 0.0
    %1291 = vmatprep.subr.mxu0 0.0
    %1292 = vmatpush1.msra.mxu0 0.0
    %1293 = vmatprep.subr.mxu0 0.0
    %1294 = vmatpush1.msra.mxu0 0.0
    %1295 = vmatprep.subr.mxu0 0.0
    %1296 = vmatpush1.msra.mxu0 0.0
    %1297 = vmatprep.subr.mxu0 0.0
    %1298 = vmatpush1.msra.mxu0 0.0
    %1299 = vmatprep.subr.mxu0 0.0
    %1300 = vmatpush1.msra.mxu0 0.0
    %1301 = vmatprep.subr.mxu0 0.0
    %1302 = vmatpush1.msra.mxu0 0.0
    %1303 = vmatprep.subr.mxu0 0.0
    %1304 = vmatpush1.msra.mxu0 0.0
    %1305 = vmatprep.subr.mxu0 0.0
    %1306 = vmatpush1.msra.mxu0 0.0
    %1307 = vmatprep.subr.mxu0 0.0
    %1308 = vmatpush1.msra.mxu0 0.0
    %1309 = vmatprep.mubr.f32.mxu0 0.0
    %1310 = vmatmul.mubr.f32.gmra.mrb[0].mxu0 %v1226
    %v1311 = vpop.f32.mrb[0].mxu0
    %v1312 = vadd.f32 0.0, %v1311
    %v1313 = vpop.f32.mrb[0].mxu0
    %1314 = vdwg.mxu0
    %v1315 = vadd.f32 %v420, %v1312
    %v1316 = vld [vmem:[%s13] sm:$0x1]
    %v1318 = vlaneseq
    %v1319 = vshrl.u32 %v1318, 7
    %v1320 = vsub.s32 0, %v1319
    %v1321 = vrot.slane %v1316, %v1320
    %v1323 = vadd.f32 %v1315, %v1321
    %v1324 = vld [vmem:[#allocation14] sm:$0xff]
    %v1325 = vld [vmem:[#allocation14 + $0x8] sm:$0xff]
    %v1326 = vld [vmem:[#allocation14 + $0x10] sm:$0xff]
    %v1327 = vld [vmem:[#allocation14 + $0x18] sm:$0xff]
    %v1328 = vld [vmem:[#allocation14 + $0x20] sm:$0xff]
    %v1329 = vld [vmem:[#allocation14 + $0x28] sm:$0xff]
    %v1330 = vld [vmem:[#allocation14 + $0x30] sm:$0xff]
    %v1331 = vld [vmem:[#allocation14 + $0x38] sm:$0xff]
    %v1332 = vld [vmem:[#allocation14 + $0x40] sm:$0xff]
    %v1333 = vld [vmem:[#allocation14 + $0x48] sm:$0xff]
    %v1334 = vld [vmem:[#allocation14 + $0x50] sm:$0xff]
    %v1335 = vld [vmem:[#allocation14 + $0x58] sm:$0xff]
    %v1336 = vld [vmem:[#allocation14 + $0x60] sm:$0xff]
    %v1337 = vld [vmem:[#allocation14 + $0x68] sm:$0xff]
    %v1338 = vld [vmem:[#allocation14 + $0x70] sm:$0xff]
    %v1339 = vld [vmem:[#allocation14 + $0x78] sm:$0xff]
    %v1340 = vld [vmem:[#allocation14 + $0x80] sm:$0xff]
    %v1341 = vld [vmem:[#allocation14 + $0x88] sm:$0xff]
    %v1342 = vld [vmem:[#allocation14 + $0x90] sm:$0xff]
    %v1343 = vld [vmem:[#allocation14 + $0x98] sm:$0xff]
    %v1344 = vld [vmem:[#allocation14 + $0xa0] sm:$0xff]
    %v1345 = vld [vmem:[#allocation14 + $0xa8] sm:$0xff]
    %v1346 = vld [vmem:[#allocation14 + $0xb0] sm:$0xff]
    %v1347 = vld [vmem:[#allocation14 + $0xb8] sm:$0xff]
    %v1348 = vld [vmem:[#allocation14 + $0xc0] sm:$0xff]
    %v1349 = vld [vmem:[#allocation14 + $0xc8] sm:$0xff]
    %v1350 = vld [vmem:[#allocation14 + $0xd0] sm:$0xff]
    %v1351 = vld [vmem:[#allocation14 + $0xd8] sm:$0xff]
    %v1352 = vld [vmem:[#allocation14 + $0xe0] sm:$0xff]
    %v1353 = vld [vmem:[#allocation14 + $0xe8] sm:$0xff]
    %v1354 = vld [vmem:[#allocation14 + $0xf0] sm:$0xff]
    %v1355 = vld [vmem:[#allocation14 + $0xf8] sm:$0xff]
    %1356 = vmatprep.subr.mxu0 %v1325
    %1357 = vmatpush1.msra.mxu0 %v1324
    %1358 = vmatprep.subr.mxu0 %v1327
    %1359 = vmatpush1.msra.mxu0 %v1326
    %1360 = vmatprep.subr.mxu0 %v1329
    %1361 = vmatpush1.msra.mxu0 %v1328
    %1362 = vmatprep.subr.mxu0 %v1331
    %1363 = vmatpush1.msra.mxu0 %v1330
    %1364 = vmatprep.subr.mxu0 %v1333
    %1365 = vmatpush1.msra.mxu0 %v1332
    %1366 = vmatprep.subr.mxu0 %v1335
    %1367 = vmatpush1.msra.mxu0 %v1334
    %1368 = vmatprep.subr.mxu0 %v1337
    %1369 = vmatpush1.msra.mxu0 %v1336
    %1370 = vmatprep.subr.mxu0 %v1339
    %1371 = vmatpush1.msra.mxu0 %v1338
    %1372 = vmatprep.subr.mxu0 %v1341
    %1373 = vmatpush1.msra.mxu0 %v1340
    %1374 = vmatprep.subr.mxu0 %v1343
    %1375 = vmatpush1.msra.mxu0 %v1342
    %1376 = vmatprep.subr.mxu0 %v1345
    %1377 = vmatpush1.msra.mxu0 %v1344
    %1378 = vmatprep.subr.mxu0 %v1347
    %1379 = vmatpush1.msra.mxu0 %v1346
    %1380 = vmatprep.subr.mxu0 %v1349
    %1381 = vmatpush1.msra.mxu0 %v1348
    %1382 = vmatprep.subr.mxu0 %v1351
    %1383 = vmatpush1.msra.mxu0 %v1350
    %1384 = vmatprep.subr.mxu0 %v1353
    %1385 = vmatpush1.msra.mxu0 %v1352
    %1386 = vmatprep.subr.mxu0 %v1355
    %1387 = vmatpush1.msra.mxu0 %v1354
    %1388 = vmatprep.subr.mxu0 0.0
    %1389 = vmatpush1.msra.mxu0 0.0
    %1390 = vmatprep.subr.mxu0 0.0
    %1391 = vmatpush1.msra.mxu0 0.0
    %1392 = vmatprep.subr.mxu0 0.0
    %1393 = vmatpush1.msra.mxu0 0.0
    %1394 = vmatprep.subr.mxu0 0.0
    %1395 = vmatpush1.msra.mxu0 0.0
    %1396 = vmatprep.subr.mxu0 0.0
    %1397 = vmatpush1.msra.mxu0 0.0
    %1398 = vmatprep.subr.mxu0 0.0
    %1399 = vmatpush1.msra.mxu0 0.0
    %1400 = vmatprep.subr.mxu0 0.0
    %1401 = vmatpush1.msra.mxu0 0.0
    %1402 = vmatprep.subr.mxu0 0.0
    %1403 = vmatpush1.msra.mxu0 0.0
    %1404 = vmatprep.subr.mxu0 0.0
    %1405 = vmatpush1.msra.mxu0 0.0
    %1406 = vmatprep.subr.mxu0 0.0
    %1407 = vmatpush1.msra.mxu0 0.0
    %1408 = vmatprep.subr.mxu0 0.0
    %1409 = vmatpush1.msra.mxu0 0.0
    %1410 = vmatprep.subr.mxu0 0.0
    %1411 = vmatpush1.msra.mxu0 0.0
    %1412 = vmatprep.subr.mxu0 0.0
    %1413 = vmatpush1.msra.mxu0 0.0
    %1414 = vmatprep.subr.mxu0 0.0
    %1415 = vmatpush1.msra.mxu0 0.0
    %1416 = vmatprep.subr.mxu0 0.0
    %1417 = vmatpush1.msra.mxu0 0.0
    %1418 = vmatprep.subr.mxu0 0.0
    %1419 = vmatpush1.msra.mxu0 0.0
    %1420 = vmatprep.mubr.f32.mxu0 0.0
    %1421 = vmatmul.mubr.f32.gmra.mrb[0].mxu0 %v1323
    %v1422 = vpop.f32.mrb[0].mxu0
    %v1423 = vadd.f32 0.0, %v1422
    %v1424 = vpop.f32.mrb[0].mxu0
    %v1425 = vadd.f32 0.0, %v1424
    %1426 = vdwg.mxu0
    %1427 = vmatprep.subr.mxu0 0.0
    %1428 = vmatpush1.msra.mxu0 %v1423
    %1429 = vmatprep.subr.mxu0 0.0
    %1430 = vmatpush1.msra.mxu0 %v1425
    %1431 = vmatprep.subr.mxu0 0.0
    %1432 = vmatpush1.msra.mxu0 0.0
    %1433 = vmatprep.subr.mxu0 0.0
    %1434 = vmatpush1.msra.mxu0 0.0
    %1435 = vmatprep.subr.mxu0 0.0
    %1436 = vmatpush1.msra.mxu0 0.0
    %1437 = vmatprep.subr.mxu0 0.0
    %1438 = vmatpush1.msra.mxu0 0.0
    %1439 = vmatprep.subr.mxu0 0.0
    %1440 = vmatpush1.msra.mxu0 0.0
    %1441 = vmatprep.subr.mxu0 0.0
    %1442 = vmatpush1.msra.mxu0 0.0
    %1443 = vmatprep.subr.mxu0 0.0
    %1444 = vmatpush1.msra.mxu0 0.0
    %1445 = vmatprep.subr.mxu0 0.0
    %1446 = vmatpush1.msra.mxu0 0.0
    %1447 = vmatprep.subr.mxu0 0.0
    %1448 = vmatpush1.msra.mxu0 0.0
    %1449 = vmatprep.subr.mxu0 0.0
    %1450 = vmatpush1.msra.mxu0 0.0
    %1451 = vmatprep.subr.mxu0 0.0
    %1452 = vmatpush1.msra.mxu0 0.0
    %1453 = vmatprep.subr.mxu0 0.0
    %1454 = vmatpush1.msra.mxu0 0.0
    %1455 = vmatprep.subr.mxu0 0.0
    %1456 = vmatpush1.msra.mxu0 0.0
    %1457 = vmatprep.subr.mxu0 0.0
    %1458 = vmatpush1.msra.mxu0 0.0
    %1459 = vmatprep.subr.mxu0 0.0
    %1460 = vmatpush1.msra.mxu0 0.0
    %1461 = vmatprep.subr.mxu0 0.0
    %1462 = vmatpush1.msra.mxu0 0.0
    %1463 = vmatprep.subr.mxu0 0.0
    %1464 = vmatpush1.msra.mxu0 0.0
    %1465 = vmatprep.subr.mxu0 0.0
    %1466 = vmatpush1.msra.mxu0 0.0
    %1467 = vmatprep.subr.mxu0 0.0
    %1468 = vmatpush1.msra.mxu0 0.0
    %1469 = vmatprep.subr.mxu0 0.0
    %1470 = vmatpush1.msra.mxu0 0.0
    %1471 = vmatprep.subr.mxu0 0.0
    %1472 = vmatpush1.msra.mxu0 0.0
    %1473 = vmatprep.subr.mxu0 0.0
    %1474 = vmatpush1.msra.mxu0 0.0
    %1475 = vmatprep.subr.mxu0 0.0
    %1476 = vmatpush1.msra.mxu0 0.0
    %1477 = vmatprep.subr.mxu0 0.0
    %1478 = vmatpush1.msra.mxu0 0.0
    %1479 = vmatprep.subr.mxu0 0.0
    %1480 = vmatpush1.msra.mxu0 0.0
    %1481 = vmatprep.subr.mxu0 0.0
    %1482 = vmatpush1.msra.mxu0 0.0
    %1483 = vmatprep.subr.mxu0 0.0
    %1484 = vmatpush1.msra.mxu0 0.0
    %1485 = vmatprep.subr.mxu0 0.0
    %1486 = vmatpush1.msra.mxu0 0.0
    %1487 = vmatprep.subr.mxu0 0.0
    %1488 = vmatpush1.msra.mxu0 0.0
    %1489 = vmatprep.subr.mxu0 0.0
    %1490 = vmatpush1.msra.mxu0 0.0
    %1491 = vmatprep.mubr.f32.mxu0 0.0
    %1492 = vmatmul.mubr.f32.gmra.mrb[0].mxu0 %v944
    %v1493 = vpop.f32.mrb[0].mxu0
    %v1494 = vadd.f32 %v816, %v1493
    %v1495 = vpop.f32.mrb[0].mxu0
    %1496 = vmatprep.mubr.f32.mxu0 0.0
    %1497 = vmatmul.mubr.f32.gmra.mrb[0].mxu0 %v947
    %v1498 = vpop.f32.mrb[0].mxu0
    %v1499 = vadd.f32 %v822, %v1498
    %v1500 = vpop.f32.mrb[0].mxu0
    %1501 = vmatprep.mubr.f32.mxu0 0.0
    %1502 = vmatmul.mubr.f32.gmra.mrb[0].mxu0 %v950
    %v1503 = vpop.f32.mrb[0].mxu0
    %v1504 = vadd.f32 %v828, %v1503
    %v1505 = vpop.f32.mrb[0].mxu0
    %1506 = vmatprep.mubr.f32.mxu0 0.0
    %1507 = vmatmul.mubr.f32.gmra.mrb[0].mxu0 %v953
    %v1508 = vpop.f32.mrb[0].mxu0
    %v1509 = vadd.f32 %v834, %v1508
    %v1510 = vpop.f32.mrb[0].mxu0
    %1511 = vmatprep.mubr.f32.mxu0 0.0
    %1512 = vmatmul.mubr.f32.gmra.mrb[0].mxu0 %v956
    %v1513 = vpop.f32.mrb[0].mxu0
    %v1514 = vadd.f32 %v840, %v1513
    %v1515 = vpop.f32.mrb[0].mxu0
    %1516 = vmatprep.mubr.f32.mxu0 0.0
    %1517 = vmatmul.mubr.f32.gmra.mrb[0].mxu0 %v959
    %v1518 = vpop.f32.mrb[0].mxu0
    %v1519 = vadd.f32 %v846, %v1518
    %v1520 = vpop.f32.mrb[0].mxu0
    %1521 = vmatprep.mubr.f32.mxu0 0.0
    %1522 = vmatmul.mubr.f32.gmra.mrb[0].mxu0 %v962
    %v1523 = vpop.f32.mrb[0].mxu0
    %v1524 = vadd.f32 %v852, %v1523
    %v1525 = vpop.f32.mrb[0].mxu0
    %1526 = vmatprep.mubr.f32.mxu0 0.0
    %1527 = vmatmul.mubr.f32.gmra.mrb[0].mxu0 %v965
    %v1528 = vpop.f32.mrb[0].mxu0
    %v1529 = vadd.f32 %v858, %v1528
    %v1530 = vpop.f32.mrb[0].mxu0
    %1531 = vmatprep.mubr.f32.mxu0 0.0
    %1532 = vmatmul.mubr.f32.gmra.mrb[0].mxu0 %v968
    %v1533 = vpop.f32.mrb[0].mxu0
    %v1534 = vadd.f32 %v864, %v1533
    %v1535 = vpop.f32.mrb[0].mxu0
    %1536 = vmatprep.mubr.f32.mxu0 0.0
    %1537 = vmatmul.mubr.f32.gmra.mrb[0].mxu0 %v971
    %v1538 = vpop.f32.mrb[0].mxu0
    %v1539 = vadd.f32 %v870, %v1538
    %v1540 = vpop.f32.mrb[0].mxu0
    %1541 = vmatprep.mubr.f32.mxu0 0.0
    %1542 = vmatmul.mubr.f32.gmra.mrb[0].mxu0 %v974
    %v1543 = vpop.f32.mrb[0].mxu0
    %v1544 = vadd.f32 %v876, %v1543
    %v1545 = vpop.f32.mrb[0].mxu0
    %1546 = vmatprep.mubr.f32.mxu0 0.0
    %1547 = vmatmul.mubr.f32.gmra.mrb[0].mxu0 %v977
    %v1548 = vpop.f32.mrb[0].mxu0
    %v1549 = vadd.f32 %v882, %v1548
    %v1550 = vpop.f32.mrb[0].mxu0
    %1551 = vmatprep.mubr.f32.mxu0 0.0
    %1552 = vmatmul.mubr.f32.gmra.mrb[0].mxu0 %v980
    %v1553 = vpop.f32.mrb[0].mxu0
    %v1554 = vadd.f32 %v888, %v1553
    %v1555 = vpop.f32.mrb[0].mxu0
    %1556 = vmatprep.mubr.f32.mxu0 0.0
    %1557 = vmatmul.mubr.f32.gmra.mrb[0].mxu0 %v983
    %v1558 = vpop.f32.mrb[0].mxu0
    %v1559 = vadd.f32 %v894, %v1558
    %v1560 = vpop.f32.mrb[0].mxu0
    %1561 = vmatprep.mubr.f32.mxu0 0.0
    %1562 = vmatmul.mubr.f32.gmra.mrb[0].mxu0 %v986
    %v1563 = vpop.f32.mrb[0].mxu0
    %v1564 = vadd.f32 %v900, %v1563
    %v1565 = vpop.f32.mrb[0].mxu0
    %1566 = vmatprep.mubr.f32.mxu0 0.0
    %1567 = vmatmul.mubr.f32.gmra.mrb[0].mxu0 %v989
    %v1568 = vpop.f32.mrb[0].mxu0
    %v1569 = vadd.f32 %v906, %v1568
    %v1570 = vpop.f32.mrb[0].mxu0
    %1571 = vdwg.mxu0
    %v1572 = vld [vmem:[%s14] sm:$0x1]
    %v1574 = vlaneseq
    %v1575 = vshrl.u32 %v1574, 7
    %v1576 = vsub.s32 0, %v1575
    %v1577 = vrot.slane %v1572, %v1576
    %v1579 = vadd.f32 %v1494, %v1577
    %v1580 = vadd.f32 %v1499, %v1577
    %v1581 = vadd.f32 %v1504, %v1577
    %v1582 = vadd.f32 %v1509, %v1577
    %v1583 = vadd.f32 %v1514, %v1577
    %v1584 = vadd.f32 %v1519, %v1577
    %v1585 = vadd.f32 %v1524, %v1577
    %v1586 = vadd.f32 %v1529, %v1577
    %v1587 = vadd.f32 %v1534, %v1577
    %v1588 = vadd.f32 %v1539, %v1577
    %v1589 = vadd.f32 %v1544, %v1577
    %v1590 = vadd.f32 %v1549, %v1577
    %v1591 = vadd.f32 %v1554, %v1577
    %v1592 = vadd.f32 %v1559, %v1577
    %v1593 = vadd.f32 %v1564, %v1577
    %v1594 = vadd.f32 %v1569, %v1577
    %v1595 = vld [vmem:[#allocation16] sm:$0xff]
    %v1596 = vld [vmem:[#allocation16 + $0x8] sm:$0xff]
    %v1597 = vld [vmem:[#allocation16 + $0x10] sm:$0xff]
    %v1598 = vld [vmem:[#allocation16 + $0x18] sm:$0xff]
    %v1599 = vld [vmem:[#allocation16 + $0x20] sm:$0xff]
    %v1600 = vld [vmem:[#allocation16 + $0x28] sm:$0xff]
    %v1601 = vld [vmem:[#allocation16 + $0x30] sm:$0xff]
    %v1602 = vld [vmem:[#allocation16 + $0x38] sm:$0xff]
    %v1603 = vld [vmem:[#allocation16 + $0x40] sm:$0xff]
    %v1604 = vld [vmem:[#allocation16 + $0x48] sm:$0xff]
    %v1605 = vld [vmem:[#allocation16 + $0x50] sm:$0xff]
    %v1606 = vld [vmem:[#allocation16 + $0x58] sm:$0xff]
    %v1607 = vld [vmem:[#allocation16 + $0x60] sm:$0xff]
    %v1608 = vld [vmem:[#allocation16 + $0x68] sm:$0xff]
    %v1609 = vld [vmem:[#allocation16 + $0x70] sm:$0xff]
    %v1610 = vld [vmem:[#allocation16 + $0x78] sm:$0xff]
    %1611 = vmatprep.subr.mxu0 0.0
    %1612 = vmatpush1.msra.mxu0 %v1595
    %1613 = vmatprep.subr.mxu0 0.0
    %1614 = vmatpush1.msra.mxu0 %v1596
    %1615 = vmatprep.subr.mxu0 0.0
    %1616 = vmatpush1.msra.mxu0 %v1597
    %1617 = vmatprep.subr.mxu0 0.0
    %1618 = vmatpush1.msra.mxu0 %v1598
    %1619 = vmatprep.subr.mxu0 0.0
    %1620 = vmatpush1.msra.mxu0 %v1599
    %1621 = vmatprep.subr.mxu0 0.0
    %1622 = vmatpush1.msra.mxu0 %v1600
    %1623 = vmatprep.subr.mxu0 0.0
    %1624 = vmatpush1.msra.mxu0 %v1601
    %1625 = vmatprep.subr.mxu0 0.0
    %1626 = vmatpush1.msra.mxu0 %v1602
    %1627 = vmatprep.subr.mxu0 0.0
    %1628 = vmatpush1.msra.mxu0 %v1603
    %1629 = vmatprep.subr.mxu0 0.0
    %1630 = vmatpush1.msra.mxu0 %v1604
    %1631 = vmatprep.subr.mxu0 0.0
    %1632 = vmatpush1.msra.mxu0 %v1605
    %1633 = vmatprep.subr.mxu0 0.0
    %1634 = vmatpush1.msra.mxu0 %v1606
    %1635 = vmatprep.subr.mxu0 0.0
    %1636 = vmatpush1.msra.mxu0 %v1607
    %1637 = vmatprep.subr.mxu0 0.0
    %1638 = vmatpush1.msra.mxu0 %v1608
    %1639 = vmatprep.subr.mxu0 0.0
    %1640 = vmatpush1.msra.mxu0 %v1609
    %1641 = vmatprep.subr.mxu0 0.0
    %1642 = vmatpush1.msra.mxu0 %v1610
    %1643 = vmatprep.subr.mxu0 0.0
    %1644 = vmatpush1.msra.mxu0 0.0
    %1645 = vmatprep.subr.mxu0 0.0
    %1646 = vmatpush1.msra.mxu0 0.0
    %1647 = vmatprep.subr.mxu0 0.0
    %1648 = vmatpush1.msra.mxu0 0.0
    %1649 = vmatprep.subr.mxu0 0.0
    %1650 = vmatpush1.msra.mxu0 0.0
    %1651 = vmatprep.subr.mxu0 0.0
    %1652 = vmatpush1.msra.mxu0 0.0
    %1653 = vmatprep.subr.mxu0 0.0
    %1654 = vmatpush1.msra.mxu0 0.0
    %1655 = vmatprep.subr.mxu0 0.0
    %1656 = vmatpush1.msra.mxu0 0.0
    %1657 = vmatprep.subr.mxu0 0.0
    %1658 = vmatpush1.msra.mxu0 0.0
    %1659 = vmatprep.subr.mxu0 0.0
    %1660 = vmatpush1.msra.mxu0 0.0
    %1661 = vmatprep.subr.mxu0 0.0
    %1662 = vmatpush1.msra.mxu0 0.0
    %1663 = vmatprep.subr.mxu0 0.0
    %1664 = vmatpush1.msra.mxu0 0.0
    %1665 = vmatprep.subr.mxu0 0.0
    %1666 = vmatpush1.msra.mxu0 0.0
    %1667 = vmatprep.subr.mxu0 0.0
    %1668 = vmatpush1.msra.mxu0 0.0
    %1669 = vmatprep.subr.mxu0 0.0
    %1670 = vmatpush1.msra.mxu0 0.0
    %1671 = vmatprep.subr.mxu0 0.0
    %1672 = vmatpush1.msra.mxu0 0.0
    %1673 = vmatprep.subr.mxu0 0.0
    %1674 = vmatpush1.msra.mxu0 0.0
    %1675 = vmatprep.mubr.f32.mxu0 0.0
    %1676 = vmatmul.mubr.f32.gmra.mrb[0].mxu0 %v1579
    %v1677 = vpop.f32.mrb[0].mxu0
    %v1678 = vadd.f32 0.0, %v1677
    %v1679 = vpop.f32.mrb[0].mxu0
    %1680 = vmatprep.mubr.f32.mxu0 0.0
    %1681 = vmatmul.mubr.f32.gmra.mrb[0].mxu0 %v1580
    %v1682 = vpop.f32.mrb[0].mxu0
    %v1683 = vadd.f32 0.0, %v1682
    %v1684 = vpop.f32.mrb[0].mxu0
    %1685 = vmatprep.mubr.f32.mxu0 0.0
    %1686 = vmatmul.mubr.f32.gmra.mrb[0].mxu0 %v1581
    %v1687 = vpop.f32.mrb[0].mxu0
    %v1688 = vadd.f32 0.0, %v1687
    %v1689 = vpop.f32.mrb[0].mxu0
    %1690 = vmatprep.mubr.f32.mxu0 0.0
    %1691 = vmatmul.mubr.f32.gmra.mrb[0].mxu0 %v1582
    %v1692 = vpop.f32.mrb[0].mxu0
    %v1693 = vadd.f32 0.0, %v1692
    %v1694 = vpop.f32.mrb[0].mxu0
    %1695 = vmatprep.mubr.f32.mxu0 0.0
    %1696 = vmatmul.mubr.f32.gmra.mrb[0].mxu0 %v1583
    %v1697 = vpop.f32.mrb[0].mxu0
    %v1698 = vadd.f32 0.0, %v1697
    %v1699 = vpop.f32.mrb[0].mxu0
    %1700 = vmatprep.mubr.f32.mxu0 0.0
    %1701 = vmatmul.mubr.f32.gmra.mrb[0].mxu0 %v1584
    %v1702 = vpop.f32.mrb[0].mxu0
    %v1703 = vadd.f32 0.0, %v1702
    %v1704 = vpop.f32.mrb[0].mxu0
    %1705 = vmatprep.mubr.f32.mxu0 0.0
    %1706 = vmatmul.mubr.f32.gmra.mrb[0].mxu0 %v1585
    %v1707 = vpop.f32.mrb[0].mxu0
    %v1708 = vadd.f32 0.0, %v1707
    %v1709 = vpop.f32.mrb[0].mxu0
    %1710 = vmatprep.mubr.f32.mxu0 0.0
    %1711 = vmatmul.mubr.f32.gmra.mrb[0].mxu0 %v1586
    %v1712 = vpop.f32.mrb[0].mxu0
    %v1713 = vadd.f32 0.0, %v1712
    %v1714 = vpop.f32.mrb[0].mxu0
    %1715 = vmatprep.mubr.f32.mxu0 0.0
    %1716 = vmatmul.mubr.f32.gmra.mrb[0].mxu0 %v1587
    %v1717 = vpop.f32.mrb[0].mxu0
    %v1718 = vadd.f32 0.0, %v1717
    %v1719 = vpop.f32.mrb[0].mxu0
    %1720 = vmatprep.mubr.f32.mxu0 0.0
    %1721 = vmatmul.mubr.f32.gmra.mrb[0].mxu0 %v1588
    %v1722 = vpop.f32.mrb[0].mxu0
    %v1723 = vadd.f32 0.0, %v1722
    %v1724 = vpop.f32.mrb[0].mxu0
    %1725 = vmatprep.mubr.f32.mxu0 0.0
    %1726 = vmatmul.mubr.f32.gmra.mrb[0].mxu0 %v1589
    %v1727 = vpop.f32.mrb[0].mxu0
    %v1728 = vadd.f32 0.0, %v1727
    %v1729 = vpop.f32.mrb[0].mxu0
    %1730 = vmatprep.mubr.f32.mxu0 0.0
    %1731 = vmatmul.mubr.f32.gmra.mrb[0].mxu0 %v1590
    %v1732 = vpop.f32.mrb[0].mxu0
    %v1733 = vadd.f32 0.0, %v1732
    %v1734 = vpop.f32.mrb[0].mxu0
    %1735 = vmatprep.mubr.f32.mxu0 0.0
    %1736 = vmatmul.mubr.f32.gmra.mrb[0].mxu0 %v1591
    %v1737 = vpop.f32.mrb[0].mxu0
    %v1738 = vadd.f32 0.0, %v1737
    %v1739 = vpop.f32.mrb[0].mxu0
    %1740 = vmatprep.mubr.f32.mxu0 0.0
    %1741 = vmatmul.mubr.f32.gmra.mrb[0].mxu0 %v1592
    %v1742 = vpop.f32.mrb[0].mxu0
    %v1743 = vadd.f32 0.0, %v1742
    %v1744 = vpop.f32.mrb[0].mxu0
    %1745 = vmatprep.mubr.f32.mxu0 0.0
    %1746 = vmatmul.mubr.f32.gmra.mrb[0].mxu0 %v1593
    %v1747 = vpop.f32.mrb[0].mxu0
    %v1748 = vadd.f32 0.0, %v1747
    %v1749 = vpop.f32.mrb[0].mxu0
    %1750 = vmatprep.mubr.f32.mxu0 0.0
    %1751 = vmatmul.mubr.f32.gmra.mrb[0].mxu0 %v1594
    %v1752 = vpop.f32.mrb[0].mxu0
    %v1753 = vadd.f32 0.0, %v1752
    %v1754 = vpop.f32.mrb[0].mxu0
    %1755 = vdwg.mxu0
    %1756 = vmatprep.subr.mxu0 0.0
    %1757 = vmatpush1.msra.mxu0 %v641
    %1758 = vmatprep.subr.mxu0 0.0
    %1759 = vmatpush1.msra.mxu0 %v643
    %1760 = vmatprep.subr.mxu0 0.0
    %1761 = vmatpush1.msra.mxu0 0.0
    %1762 = vmatprep.subr.mxu0 0.0
    %1763 = vmatpush1.msra.mxu0 0.0
    %1764 = vmatprep.subr.mxu0 0.0
    %1765 = vmatpush1.msra.mxu0 0.0
    %1766 = vmatprep.subr.mxu0 0.0
    %1767 = vmatpush1.msra.mxu0 0.0
    %1768 = vmatprep.subr.mxu0 0.0
    %1769 = vmatpush1.msra.mxu0 0.0
    %1770 = vmatprep.subr.mxu0 0.0
    %1771 = vmatpush1.msra.mxu0 0.0
    %1772 = vmatprep.subr.mxu0 0.0
    %1773 = vmatpush1.msra.mxu0 0.0
    %1774 = vmatprep.subr.mxu0 0.0
    %1775 = vmatpush1.msra.mxu0 0.0
    %1776 = vmatprep.subr.mxu0 0.0
    %1777 = vmatpush1.msra.mxu0 0.0
    %1778 = vmatprep.subr.mxu0 0.0
    %1779 = vmatpush1.msra.mxu0 0.0
    %1780 = vmatprep.subr.mxu0 0.0
    %1781 = vmatpush1.msra.mxu0 0.0
    %1782 = vmatprep.subr.mxu0 0.0
    %1783 = vmatpush1.msra.mxu0 0.0
    %1784 = vmatprep.subr.mxu0 0.0
    %1785 = vmatpush1.msra.mxu0 0.0
    %1786 = vmatprep.subr.mxu0 0.0
    %1787 = vmatpush1.msra.mxu0 0.0
    %1788 = vmatprep.subr.mxu0 0.0
    %1789 = vmatpush1.msra.mxu0 0.0
    %1790 = vmatprep.subr.mxu0 0.0
    %1791 = vmatpush1.msra.mxu0 0.0
    %1792 = vmatprep.subr.mxu0 0.0
    %1793 = vmatpush1.msra.mxu0 0.0
    %1794 = vmatprep.subr.mxu0 0.0
    %1795 = vmatpush1.msra.mxu0 0.0
    %1796 = vmatprep.subr.mxu0 0.0
    %1797 = vmatpush1.msra.mxu0 0.0
    %1798 = vmatprep.subr.mxu0 0.0
    %1799 = vmatpush1.msra.mxu0 0.0
    %1800 = vmatprep.subr.mxu0 0.0
    %1801 = vmatpush1.msra.mxu0 0.0
    %1802 = vmatprep.subr.mxu0 0.0
    %1803 = vmatpush1.msra.mxu0 0.0
    %1804 = vmatprep.subr.mxu0 0.0
    %1805 = vmatpush1.msra.mxu0 0.0
    %1806 = vmatprep.subr.mxu0 0.0
    %1807 = vmatpush1.msra.mxu0 0.0
    %1808 = vmatprep.subr.mxu0 0.0
    %1809 = vmatpush1.msra.mxu0 0.0
    %1810 = vmatprep.subr.mxu0 0.0
    %1811 = vmatpush1.msra.mxu0 0.0
    %1812 = vmatprep.subr.mxu0 0.0
    %1813 = vmatpush1.msra.mxu0 0.0
    %1814 = vmatprep.subr.mxu0 0.0
    %1815 = vmatpush1.msra.mxu0 0.0
    %1816 = vmatprep.subr.mxu0 0.0
    %1817 = vmatpush1.msra.mxu0 0.0
    %1818 = vmatprep.subr.mxu0 0.0
    %1819 = vmatpush1.msra.mxu0 0.0
    %1820 = vmatprep.mubr.f32.mxu0 0.0
    %1821 = vmatmul.mubr.f32.gmra.mrb[0].mxu0 %v944
    %v1822 = vpop.f32.mrb[0].mxu0
    %v1823 = vadd.f32 %v1678, %v1822
    %v1824 = vpop.f32.mrb[0].mxu0
    %1825 = vmatprep.mubr.f32.mxu0 0.0
    %1826 = vmatmul.mubr.f32.gmra.mrb[0].mxu0 %v947
    %v1827 = vpop.f32.mrb[0].mxu0
    %v1828 = vadd.f32 %v1683, %v1827
    %v1829 = vpop.f32.mrb[0].mxu0
    %1830 = vmatprep.mubr.f32.mxu0 0.0
    %1831 = vmatmul.mubr.f32.gmra.mrb[0].mxu0 %v950
    %v1832 = vpop.f32.mrb[0].mxu0
    %v1833 = vadd.f32 %v1688, %v1832
    %v1834 = vpop.f32.mrb[0].mxu0
    %1835 = vmatprep.mubr.f32.mxu0 0.0
    %1836 = vmatmul.mubr.f32.gmra.mrb[0].mxu0 %v953
    %v1837 = vpop.f32.mrb[0].mxu0
    %v1838 = vadd.f32 %v1693, %v1837
    %v1839 = vpop.f32.mrb[0].mxu0
    %1840 = vmatprep.mubr.f32.mxu0 0.0
    %1841 = vmatmul.mubr.f32.gmra.mrb[0].mxu0 %v956
    %v1842 = vpop.f32.mrb[0].mxu0
    %v1843 = vadd.f32 %v1698, %v1842
    %v1844 = vpop.f32.mrb[0].mxu0
    %1845 = vmatprep.mubr.f32.mxu0 0.0
    %1846 = vmatmul.mubr.f32.gmra.mrb[0].mxu0 %v959
    %v1847 = vpop.f32.mrb[0].mxu0
    %v1848 = vadd.f32 %v1703, %v1847
    %v1849 = vpop.f32.mrb[0].mxu0
    %1850 = vmatprep.mubr.f32.mxu0 0.0
    %1851 = vmatmul.mubr.f32.gmra.mrb[0].mxu0 %v962
    %v1852 = vpop.f32.mrb[0].mxu0
    %v1853 = vadd.f32 %v1708, %v1852
    %v1854 = vpop.f32.mrb[0].mxu0
    %1855 = vmatprep.mubr.f32.mxu0 0.0
    %1856 = vmatmul.mubr.f32.gmra.mrb[0].mxu0 %v965
    %v1857 = vpop.f32.mrb[0].mxu0
    %v1858 = vadd.f32 %v1713, %v1857
    %v1859 = vpop.f32.mrb[0].mxu0
    %1860 = vmatprep.mubr.f32.mxu0 0.0
    %1861 = vmatmul.mubr.f32.gmra.mrb[0].mxu0 %v968
    %v1862 = vpop.f32.mrb[0].mxu0
    %v1863 = vadd.f32 %v1718, %v1862
    %v1864 = vpop.f32.mrb[0].mxu0
    %1865 = vmatprep.mubr.f32.mxu0 0.0
    %1866 = vmatmul.mubr.f32.gmra.mrb[0].mxu0 %v971
    %v1867 = vpop.f32.mrb[0].mxu0
    %v1868 = vadd.f32 %v1723, %v1867
    %v1869 = vpop.f32.mrb[0].mxu0
    %1870 = vmatprep.mubr.f32.mxu0 0.0
    %1871 = vmatmul.mubr.f32.gmra.mrb[0].mxu0 %v974
    %v1872 = vpop.f32.mrb[0].mxu0
    %v1873 = vadd.f32 %v1728, %v1872
    %v1874 = vpop.f32.mrb[0].mxu0
    %1875 = vmatprep.mubr.f32.mxu0 0.0
    %1876 = vmatmul.mubr.f32.gmra.mrb[0].mxu0 %v977
    %v1877 = vpop.f32.mrb[0].mxu0
    %v1878 = vadd.f32 %v1733, %v1877
    %v1879 = vpop.f32.mrb[0].mxu0
    %1880 = vmatprep.mubr.f32.mxu0 0.0
    %1881 = vmatmul.mubr.f32.gmra.mrb[0].mxu0 %v980
    %v1882 = vpop.f32.mrb[0].mxu0
    %v1883 = vadd.f32 %v1738, %v1882
    %v1884 = vpop.f32.mrb[0].mxu0
    %1885 = vmatprep.mubr.f32.mxu0 0.0
    %1886 = vmatmul.mubr.f32.gmra.mrb[0].mxu0 %v983
    %v1887 = vpop.f32.mrb[0].mxu0
    %v1888 = vadd.f32 %v1743, %v1887
    %v1889 = vpop.f32.mrb[0].mxu0
    %1890 = vmatprep.mubr.f32.mxu0 0.0
    %1891 = vmatmul.mubr.f32.gmra.mrb[0].mxu0 %v986
    %v1892 = vpop.f32.mrb[0].mxu0
    %v1893 = vadd.f32 %v1748, %v1892
    %v1894 = vpop.f32.mrb[0].mxu0
    %1895 = vmatprep.mubr.f32.mxu0 0.0
    %1896 = vmatmul.mubr.f32.gmra.mrb[0].mxu0 %v989
    %v1897 = vpop.f32.mrb[0].mxu0
    %v1898 = vadd.f32 %v1753, %v1897
    %v1899 = vpop.f32.mrb[0].mxu0
    %1900 = vdwg.mxu0
    %v1901 = vld [vmem:[%s15] sm:$0x1]
    %v1903 = vlaneseq
    %v1904 = vshrl.u32 %v1903, 7
    %v1905 = vsub.s32 0, %v1904
    %v1906 = vrot.slane %v1901, %v1905
    %v1908 = vadd.f32 %v1823, %v1906
    %v1909 = vadd.f32 %v1828, %v1906
    %v1910 = vadd.f32 %v1833, %v1906
    %v1911 = vadd.f32 %v1838, %v1906
    %v1912 = vadd.f32 %v1843, %v1906
    %v1913 = vadd.f32 %v1848, %v1906
    %v1914 = vadd.f32 %v1853, %v1906
    %v1915 = vadd.f32 %v1858, %v1906
    %v1916 = vadd.f32 %v1863, %v1906
    %v1917 = vadd.f32 %v1868, %v1906
    %v1918 = vadd.f32 %v1873, %v1906
    %v1919 = vadd.f32 %v1878, %v1906
    %v1920 = vadd.f32 %v1883, %v1906
    %v1921 = vadd.f32 %v1888, %v1906
    %v1922 = vadd.f32 %v1893, %v1906
    %v1923 = vadd.f32 %v1898, %v1906
    %1924 = vmatprep.subr.mxu0 0.0
    %1925 = vmatpush1.msra.mxu0 %v1908
    %1926 = vmatprep.subr.mxu0 0.0
    %1927 = vmatpush1.msra.mxu0 %v1909
    %1928 = vmatprep.subr.mxu0 0.0
    %1929 = vmatpush1.msra.mxu0 %v1910
    %1930 = vmatprep.subr.mxu0 0.0
    %1931 = vmatpush1.msra.mxu0 %v1911
    %1932 = vmatprep.subr.mxu0 0.0
    %1933 = vmatpush1.msra.mxu0 %v1912
    %1934 = vmatprep.subr.mxu0 0.0
    %1935 = vmatpush1.msra.mxu0 %v1913
    %1936 = vmatprep.subr.mxu0 0.0
    %1937 = vmatpush1.msra.mxu0 %v1914
    %1938 = vmatprep.subr.mxu0 0.0
    %1939 = vmatpush1.msra.mxu0 %v1915
    %1940 = vmatprep.subr.mxu0 0.0
    %1941 = vmatpush1.msra.mxu0 %v1916
    %1942 = vmatprep.subr.mxu0 0.0
    %1943 = vmatpush1.msra.mxu0 %v1917
    %1944 = vmatprep.subr.mxu0 0.0
    %1945 = vmatpush1.msra.mxu0 %v1918
    %1946 = vmatprep.subr.mxu0 0.0
    %1947 = vmatpush1.msra.mxu0 %v1919
    %1948 = vmatprep.subr.mxu0 0.0
    %1949 = vmatpush1.msra.mxu0 %v1920
    %1950 = vmatprep.subr.mxu0 0.0
    %1951 = vmatpush1.msra.mxu0 %v1921
    %1952 = vmatprep.subr.mxu0 0.0
    %1953 = vmatpush1.msra.mxu0 %v1922
    %1954 = vmatprep.subr.mxu0 0.0
    %1955 = vmatpush1.msra.mxu0 %v1923
    %1956 = vmatprep.subr.mxu0 0.0
    %1957 = vmatpush1.msra.mxu0 0.0
    %1958 = vmatprep.subr.mxu0 0.0
    %1959 = vmatpush1.msra.mxu0 0.0
    %1960 = vmatprep.subr.mxu0 0.0
    %1961 = vmatpush1.msra.mxu0 0.0
    %1962 = vmatprep.subr.mxu0 0.0
    %1963 = vmatpush1.msra.mxu0 0.0
    %1964 = vmatprep.subr.mxu0 0.0
    %1965 = vmatpush1.msra.mxu0 0.0
    %1966 = vmatprep.subr.mxu0 0.0
    %1967 = vmatpush1.msra.mxu0 0.0
    %1968 = vmatprep.subr.mxu0 0.0
    %1969 = vmatpush1.msra.mxu0 0.0
    %1970 = vmatprep.subr.mxu0 0.0
    %1971 = vmatpush1.msra.mxu0 0.0
    %1972 = vmatprep.subr.mxu0 0.0
    %1973 = vmatpush1.msra.mxu0 0.0
    %1974 = vmatprep.subr.mxu0 0.0
    %1975 = vmatpush1.msra.mxu0 0.0
    %1976 = vmatprep.subr.mxu0 0.0
    %1977 = vmatpush1.msra.mxu0 0.0
    %1978 = vmatprep.subr.mxu0 0.0
    %1979 = vmatpush1.msra.mxu0 0.0
    %1980 = vmatprep.subr.mxu0 0.0
    %1981 = vmatpush1.msra.mxu0 0.0
    %1982 = vmatprep.subr.mxu0 0.0
    %1983 = vmatpush1.msra.mxu0 0.0
    %1984 = vmatprep.subr.mxu0 0.0
    %1985 = vmatpush1.msra.mxu0 0.0
    %1986 = vmatprep.subr.mxu0 0.0
    %1987 = vmatpush1.msra.mxu0 0.0
    %1988 = vmatprep.mubr.f32.mxu0 0.0
    %1989 = vmatmul.mubr.f32.gmra.mrb[0].mxu0 %v215
    %v1990 = vpop.f32.mrb[0].mxu0
    %v1991 = vadd.f32 0.0, %v1990
    %v1992 = vpop.f32.mrb[0].mxu0
    %1993 = vdwg.mxu0
    %v1994 = vld [vmem:[#allocation17] sm:$0xff]
    %v1995 = vld [vmem:[#allocation17 + $0x8] sm:$0xff]
    %v1996 = vld [vmem:[#allocation17 + $0x10] sm:$0xff]
    %v1997 = vld [vmem:[#allocation17 + $0x18] sm:$0xff]
    %v1998 = vld [vmem:[#allocation17 + $0x20] sm:$0xff]
    %v1999 = vld [vmem:[#allocation17 + $0x28] sm:$0xff]
    %v2000 = vld [vmem:[#allocation17 + $0x30] sm:$0xff]
    %v2001 = vld [vmem:[#allocation17 + $0x38] sm:$0xff]
    %v2002 = vld [vmem:[#allocation17 + $0x40] sm:$0xff]
    %v2003 = vld [vmem:[#allocation17 + $0x48] sm:$0xff]
    %v2004 = vld [vmem:[#allocation17 + $0x50] sm:$0xff]
    %v2005 = vld [vmem:[#allocation17 + $0x58] sm:$0xff]
    %v2006 = vld [vmem:[#allocation17 + $0x60] sm:$0xff]
    %v2007 = vld [vmem:[#allocation17 + $0x68] sm:$0xff]
    %v2008 = vld [vmem:[#allocation17 + $0x70] sm:$0xff]
    %v2009 = vld [vmem:[#allocation17 + $0x78] sm:$0xff]
    %2010 = vmatprep.subr.mxu0 0.0
    %2011 = vmatpush1.msra.mxu0 %v1994
    %2012 = vmatprep.subr.mxu0 0.0
    %2013 = vmatpush1.msra.mxu0 %v1995
    %2014 = vmatprep.subr.mxu0 0.0
    %2015 = vmatpush1.msra.mxu0 %v1996
    %2016 = vmatprep.subr.mxu0 0.0
    %2017 = vmatpush1.msra.mxu0 %v1997
    %2018 = vmatprep.subr.mxu0 0.0
    %2019 = vmatpush1.msra.mxu0 %v1998
    %2020 = vmatprep.subr.mxu0 0.0
    %2021 = vmatpush1.msra.mxu0 %v1999
    %2022 = vmatprep.subr.mxu0 0.0
    %2023 = vmatpush1.msra.mxu0 %v2000
    %2024 = vmatprep.subr.mxu0 0.0
    %2025 = vmatpush1.msra.mxu0 %v2001
    %2026 = vmatprep.subr.mxu0 0.0
    %2027 = vmatpush1.msra.mxu0 %v2002
    %2028 = vmatprep.subr.mxu0 0.0
    %2029 = vmatpush1.msra.mxu0 %v2003
    %2030 = vmatprep.subr.mxu0 0.0
    %2031 = vmatpush1.msra.mxu0 %v2004
    %2032 = vmatprep.subr.mxu0 0.0
    %2033 = vmatpush1.msra.mxu0 %v2005
    %2034 = vmatprep.subr.mxu0 0.0
    %2035 = vmatpush1.msra.mxu0 %v2006
    %2036 = vmatprep.subr.mxu0 0.0
    %2037 = vmatpush1.msra.mxu0 %v2007
    %2038 = vmatprep.subr.mxu0 0.0
    %2039 = vmatpush1.msra.mxu0 %v2008
    %2040 = vmatprep.subr.mxu0 0.0
    %2041 = vmatpush1.msra.mxu0 %v2009
    %2042 = vmatprep.subr.mxu0 0.0
    %2043 = vmatpush1.msra.mxu0 0.0
    %2044 = vmatprep.subr.mxu0 0.0
    %2045 = vmatpush1.msra.mxu0 0.0
    %2046 = vmatprep.subr.mxu0 0.0
    %2047 = vmatpush1.msra.mxu0 0.0
    %2048 = vmatprep.subr.mxu0 0.0
    %2049 = vmatpush1.msra.mxu0 0.0
    %2050 = vmatprep.subr.mxu0 0.0
    %2051 = vmatpush1.msra.mxu0 0.0
    %2052 = vmatprep.subr.mxu0 0.0
    %2053 = vmatpush1.msra.mxu0 0.0
    %2054 = vmatprep.subr.mxu0 0.0
    %2055 = vmatpush1.msra.mxu0 0.0
    %2056 = vmatprep.subr.mxu0 0.0
    %2057 = vmatpush1.msra.mxu0 0.0
    %2058 = vmatprep.subr.mxu0 0.0
    %2059 = vmatpush1.msra.mxu0 0.0
    %2060 = vmatprep.subr.mxu0 0.0
    %2061 = vmatpush1.msra.mxu0 0.0
    %2062 = vmatprep.subr.mxu0 0.0
    %2063 = vmatpush1.msra.mxu0 0.0
    %2064 = vmatprep.subr.mxu0 0.0
    %2065 = vmatpush1.msra.mxu0 0.0
    %2066 = vmatprep.subr.mxu0 0.0
    %2067 = vmatpush1.msra.mxu0 0.0
    %2068 = vmatprep.subr.mxu0 0.0
    %2069 = vmatpush1.msra.mxu0 0.0
    %2070 = vmatprep.subr.mxu0 0.0
    %2071 = vmatpush1.msra.mxu0 0.0
    %2072 = vmatprep.subr.mxu0 0.0
    %2073 = vmatpush1.msra.mxu0 0.0
    %2074 = vmatprep.mubr.f32.mxu0 0.0
    %2075 = vmatmul.mubr.f32.gmra.mrb[0].mxu0 %v1991
    %v2076 = vpop.f32.mrb[0].mxu0
    %v2077 = vadd.f32 0.0, %v2076
    %v2078 = vpop.f32.mrb[0].mxu0
    %2079 = vdwg.mxu0
    %v2080 = vadd.f32 %v712, %v2077
    %v2081 = vld [vmem:[%s16] sm:$0x1]
    %v2083 = vlaneseq
    %v2084 = vshrl.u32 %v2083, 7
    %v2085 = vsub.s32 0, %v2084
    %v2086 = vrot.slane %v2081, %v2085
    %v2088 = vadd.f32 %v2080, %v2086
    %2089 = vst [vmem:[#allocation19] sm:$0xff] %v1323
    %2090 = vst [vmem:[#allocation20] sm:$0xff] %v1579
    %2091 = vst [vmem:[#allocation20 + $0x8] sm:$0xff] %v1580
    %2092 = vst [vmem:[#allocation20 + $0x10] sm:$0xff] %v1581
    %2093 = vst [vmem:[#allocation20 + $0x18] sm:$0xff] %v1582
    %2094 = vst [vmem:[#allocation20 + $0x20] sm:$0xff] %v1583
    %2095 = vst [vmem:[#allocation20 + $0x28] sm:$0xff] %v1584
    %2096 = vst [vmem:[#allocation20 + $0x30] sm:$0xff] %v1585
    %2097 = vst [vmem:[#allocation20 + $0x38] sm:$0xff] %v1586
    %2098 = vst [vmem:[#allocation20 + $0x40] sm:$0xff] %v1587
    %2099 = vst [vmem:[#allocation20 + $0x48] sm:$0xff] %v1588
    %2100 = vst [vmem:[#allocation20 + $0x50] sm:$0xff] %v1589
    %2101 = vst [vmem:[#allocation20 + $0x58] sm:$0xff] %v1590
    %2102 = vst [vmem:[#allocation20 + $0x60] sm:$0xff] %v1591
    %2103 = vst [vmem:[#allocation20 + $0x68] sm:$0xff] %v1592
    %2104 = vst [vmem:[#allocation20 + $0x70] sm:$0xff] %v1593
    %2105 = vst [vmem:[#allocation20 + $0x78] sm:$0xff] %v1594
    %2106 = vst [vmem:[#allocation22] sm:$0xff] %v2088
    // Predicated region
    $region110: #{tpu_custom_call.1} parent=1 // pred_check
      _
    $region111: #{tpu_custom_call.1} parent=1 // pred_check_branch
      %2108 = sbr.rel (0) target = $region113
    $region112: #{tpu_custom_call.1} parent=1 // pred_region
      %s2110 = ssub.s32 128, 128
      %2111 = vsyncadd [#allocation4], %s2110
      %s2113 = sshll.u32 [#allocation19], 4
      %s2114 = int_to_ptr.vmem [resolvable:$true] %s2113
      %2116 = dma.vmem_to_hbm [thread:$0]  %s2114, 128, %s17, [#allocation4]
    $region113: #{tpu_custom_call.1} parent=1 // pred_fallthru
      _
    // Predicated region
    $region114: #{tpu_custom_call.1} parent=1 // pred_check
      _
    $region115: #{tpu_custom_call.1} parent=1 // pred_check_branch
      %2118 = sbr.rel (0) target = $region117
    $region116: #{tpu_custom_call.1} parent=1 // pred_region
      %s2120 = ssub.s32 2048, 2048
      %2121 = vsyncadd [#allocation21], %s2120
      %s2122 = sshll.u32 [#allocation20], 4
      %s2123 = int_to_ptr.vmem [resolvable:$true] %s2122
      %2128 = dma.vmem_to_hbm [thread:$0]  %s2123, 2048, %s18, [#allocation21], 128, 128, 8
    $region117: #{tpu_custom_call.1} parent=1 // pred_fallthru
      _
    // Predicated region
    $region118: #{tpu_custom_call.1} parent=1 // pred_check
      _
    $region119: #{tpu_custom_call.1} parent=1 // pred_check_branch
      %2130 = sbr.rel (0) target = $region121
    $region120: #{tpu_custom_call.1} parent=1 // pred_region
      %s2132 = ssub.s32 128, 128
      %2133 = vsyncadd [#allocation21], %s2132
      %s2135 = sshll.u32 [#allocation22], 4
      %s2136 = int_to_ptr.vmem [resolvable:$true] %s2135
      %2138 = dma.vmem_to_hbm [thread:$0]  %s2136, 128, %s19, [#allocation21]
    $region121: #{tpu_custom_call.1} parent=1 // pred_fallthru
      _
    // Predicated region
    $region122: #{tpu_custom_call.1} parent=1 // pred_check
      _
    $region123: #{tpu_custom_call.1} parent=1 // pred_check_branch
      %2140 = sbr.rel (0) target = $region125
    $region124: #{tpu_custom_call.1} parent=1 // pred_region
      %2141 = dma.done [#allocation4], 128
    $region125: #{tpu_custom_call.1} parent=1 // pred_fallthru
      _
    // Predicated region
    $region126: #{tpu_custom_call.1} parent=1 // pred_check
      _
    $region127: #{tpu_custom_call.1} parent=1 // pred_check_branch
      %2143 = sbr.rel (0) target = $region129
    $region128: #{tpu_custom_call.1} parent=1 // pred_region
      %2144 = dma.done [#allocation21], 2048
    $region129: #{tpu_custom_call.1} parent=1 // pred_fallthru
      _
    // Predicated region
    $region130: #{tpu_custom_call.1} parent=1 // pred_check
      _
    $region131: #{tpu_custom_call.1} parent=1 // pred_check_branch
      %2146 = sbr.rel (0) target = $region133
    $region132: #{tpu_custom_call.1} parent=1 // pred_region
      %2147 = dma.done [#allocation21], 128
    $region133: #{tpu_custom_call.1} parent=1 // pred_fallthru
      _
    %2148 = vsyncpa [#allocation3], 1
    %2149 = vsyncpa [#allocation6], 1
    %2150 = vsyncpa [#allocation9], 1
    %2151 = vsyncpa [#allocation12], 1
    %2152 = vsyncpa [#allocation15], 1
    %2153 = vsyncpa [#allocation18], 1
    %2154 = vsyncpa [#allocation4], 1
    %2155 = vsyncpa [#allocation21], 1

</llo_original>
